<compile_context>
chip_gen: v6e
topology: v6e:2x2x1
jax: 0.10.0
libtpu: 0.0.40
codegen_flags: <defaults>
</compile_context>

<pallas_src>
import math

import jax
import jax.numpy as jnp
import numpy as np
from jax import lax
from jax.experimental import pallas as pl
from jax.experimental.pallas import tpu as pltpu


def make_kernel(n_head, d_head, seqlen, d_model, eps):
    N, Dh, S, D = n_head, d_head, seqlen, d_model
    NDh = N * Dh
    scale = 1.0 / math.sqrt(Dh)
    nbits = max(1, (S - 1).bit_length())

    def kernel(x_ref, wqkv_ref, wo_ref, remb_ref, rwb_ref, rbias_ref,
               gamma_ref, beta_ref, out_ref):
        # One grid step == one batch element.
        x = x_ref[...]                                            # [S, D], f32

        # ---- fused QKV projection (one MXU matmul for all heads) ----
        heads = jnp.dot(x, wqkv_ref[...],
                        preferred_element_type=jnp.float32)       # [S, 3*N*Dh]

        # Fold the softmax scale into the q path (q, r_w_bias, r_bias) once,
        # instead of scaling every [S, S] score matrix.
        q_all = heads[:, :NDh] * scale                            # [S, N*Dh]
        rwb_all = rwb_ref[...] * scale                            # [N, Dh]
        rbias_all = rbias_ref[...] * scale                        # [N, S]

        # ---- hoisted iotas / masks shared by every head ----
        row = lax.broadcasted_iota(jnp.int32, (S, S), 0)
        col = lax.broadcasted_iota(jnp.int32, (S, S), 1)
        shift_amt = jnp.where(row + 1 == S, 0, row + 1)           # per-row roll amount
        bit_take = [((shift_amt >> b) & 1) == 1 for b in range(nbits)]
        lower = col <= row                                        # valid (relative) region
        upper = col >= row + 2                                    # "wrapped" region

        def rel_shift(e):
            # Exact torch _rel_shift(zero_triu=False) on a square [S, S] slice,
            # including the wrapped upper-triangle values that survive with no attn_mask:
            #   out[i, j] = e[i, j - i + S - 1]   for j <= i
            #   out[i, i+1] = 0
            #   out[i, j] = e[i+1, j - i - 2]     for j >= i + 2
            # Barrel shifter: y[i, j] = e[i, (j - i - 1) % S].
            # TODO(synk): use pltpu.roll here once the rolled dims are (8,128)-aligned.
            y = e
            for b in range(nbits):
                s = 1 << b
                if s >= S:
                    break
                rolled = jnp.concatenate([y[:, S - s:], y[:, :S - s]], axis=1)
                y = jnp.where(bit_take[b], rolled, y)
            y_up = jnp.concatenate([y[1:, :], y[:1, :]], axis=0)  # y[i+1] (last row unused)
            return jnp.where(lower, y, 0.0) + jnp.where(upper, y_up, 0.0)

        # ---- per-head attention; output projection accumulated (no attn_vec concat) ----
        # N is tiny (2) so static unrolling is fine; switch to lax.fori_loop if N grows.
        attn_out = None
        for n in range(N):
            q = q_all[:, n * Dh:(n + 1) * Dh]                     # [S, Dh] (pre-scaled)
            k = heads[:, NDh + n * Dh:NDh + (n + 1) * Dh]         # [S, Dh]
            v = heads[:, 2 * NDh + n * Dh:2 * NDh + (n + 1) * Dh]

            rwq = q + rwb_all[n:n + 1, :]
            ac = lax.dot_general(rwq, k, (((1,), (1,)), ((), ())),
                                 preferred_element_type=jnp.float32)     # [S, S]
            b_mat = lax.dot_general(q, remb_ref[n], (((1,), (1,)), ((), ())),
                                    preferred_element_type=jnp.float32)  # [S, S]
            score = ac + rel_shift(b_mat + rbias_all[n:n + 1, :])

            m = jnp.max(score, axis=-1, keepdims=True)
            p = jnp.exp(score - m)
            l = jnp.sum(p, axis=-1, keepdims=True)
            prob = p * pl.reciprocal(l, approx=True)              # EUP, frees VALU divide
            av = jnp.dot(prob, v, preferred_element_type=jnp.float32)    # [S, Dh]

            contrib = jnp.dot(av, wo_ref[n * Dh:(n + 1) * Dh, :],
                              preferred_element_type=jnp.float32)        # [S, D]
            attn_out = contrib if attn_out is None else attn_out + contrib

        # ---- residual + LayerNorm (post-norm), stored per-batch block ----
        y = x + attn_out
        mu = jnp.mean(y, axis=-1, keepdims=True)
        var = jnp.mean(jnp.square(y - mu), axis=-1, keepdims=True)
        ynorm = (y - mu) * lax.rsqrt(var + eps)
        out_ref[...] = (ynorm * gamma_ref[...] + beta_ref[...]).astype(out_ref.dtype)

    return kernel


def rel_learnable_mha(w, r_emb, r_w_bias, r_bias, wqkv, wo, gamma, beta,
                      n_head, d_head, eps=1e-5):
    """Forward of RelLearnableMultiHeadAttn (mems=None, attn_mask=None, pre_lnorm=False)."""
    S, B, D = w.shape
    N, Dh = n_head, d_head
    NDh = N * Dh
    assert r_emb.shape[0] >= S  # TODO(synk): klen > r_emb rows padding branch not implemented

    r_emb_k = r_emb[-S:]                                          # [S, N, Dh]
    r_bias_k = r_bias[-S:]                                        # [S, N]

    # Layout glue (parameter-sized, done once outside the kernel).
    w2d = jnp.transpose(w, (1, 0, 2)).reshape(B * S, D).astype(jnp.float32)   # [B*S, D]
    wqkv_t = wqkv.T.astype(jnp.float32)                           # [D, 3*N*Dh]
    wo_t = wo.T.astype(jnp.float32)                               # [N*Dh, D]
    remb = jnp.transpose(r_emb_k, (1, 0, 2)).astype(jnp.float32)  # [N, S, Dh]
    rbias = jnp.transpose(r_bias_k, (1, 0)).astype(jnp.float32)   # [N, S]
    rwb = r_w_bias.astype(jnp.float32)                            # [N, Dh]
    gamma2 = gamma.reshape(1, D).astype(jnp.float32)
    beta2 = beta.reshape(1, D).astype(jnp.float32)

    kernel = make_kernel(N, Dh, S, D, eps)
    out2d = pl.pallas_call(
        kernel,
        out_shape=jax.ShapeDtypeStruct((B * S, D), jnp.float32),
        grid_spec=pl.GridSpec(
            grid=(B,),                                            # one step per batch
            in_specs=[
                pl.BlockSpec((S, D), lambda b: (b, 0)),           # hidden rows of batch b
                pl.BlockSpec((D, 3 * NDh), lambda b: (0, 0)),     # W_qkv^T (resident)
                pl.BlockSpec((NDh, D), lambda b: (0, 0)),         # W_o^T   (resident)
                pl.BlockSpec((N, S, Dh), lambda b: (0, 0, 0)),    # r_emb per head
                pl.BlockSpec((N, Dh), lambda b: (0, 0)),          # r_w_bias
                pl.BlockSpec((N, S), lambda b: (0, 0)),           # r_bias per head
                pl.BlockSpec((1, D), lambda b: (0, 0)),           # ln gamma
                pl.BlockSpec((1, D), lambda b: (0, 0)),           # ln beta
            ],
            out_specs=pl.BlockSpec((S, D), lambda b: (b, 0)),
        ),
        compiler_params=pltpu.CompilerParams(
            dimension_semantics=("parallel",)),                   # v7x: split batches across TCs
    )(w2d, wqkv_t, wo_t, remb, rwb, rbias, gamma2, beta2)
    return jnp.transpose(out2d.reshape(B, S, D), (1, 0, 2))


# ------------------------- pure-JAX reference (mirrors torch) -------------------------
def _rel_shift_ref(x):
    Q, K = x.shape[0], x.shape[1]
    zero_pad = jnp.zeros((Q, 1) + x.shape[2:], x.dtype)
    x_padded = jnp.concatenate([zero_pad, x], axis=1)
    x_padded = x_padded.reshape((K + 1, Q) + x.shape[2:])
    return x_padded[1:].reshape(x.shape)


def ref_forward(w, r_emb, r_w_bias, r_bias, wqkv, wo, gamma, beta,
                n_head, d_head, eps=1e-5):
    S, B, D = w.shape
    N, Dh = n_head, d_head
    scale = 1.0 / math.sqrt(Dh)
    w_heads = jnp.einsum('sbd,ed->sbe', w, wqkv)
    q, k, v = jnp.split(w_heads, 3, axis=-1)
    q = q.reshape(S, B, N, Dh)
    k = k.reshape(S, B, N, Dh)
    v = v.reshape(S, B, N, Dh)
    r_emb_k = r_emb[-S:]
    r_bias_k = r_bias[-S:]
    rwq = q + r_w_bias[None]
    AC = jnp.einsum('ibnd,jbnd->ijbn', rwq, k)
    B_ = jnp.einsum('ibnd,jnd->ijbn', q, r_emb_k)
    D_ = r_bias_k[None, :, None]
    BD = _rel_shift_ref(B_ + D_)
    attn_score = (AC + BD) * scale
    attn_prob = jax.nn.softmax(attn_score, axis=1)
    attn_vec = jnp.einsum('ijbn,jbnd->ibnd', attn_prob, v)
    attn_vec = attn_vec.reshape(S, B, N * Dh)
    attn_out = jnp.einsum('sbe,de->sbd', attn_vec, wo)
    y = w + attn_out
    mu = jnp.mean(y, axis=-1, keepdims=True)
    var = jnp.mean(jnp.square(y - mu), axis=-1, keepdims=True)
    return (y - mu) / jnp.sqrt(var + eps) * gamma + beta


if __name__ == "__main__":
    n_head, d_model, d_head = 2, 32, 16
    qlen, bsz, rlen = 16, 2, 16

    key = jax.random.PRNGKey(0)
    ks = jax.random.split(key, 6)
    w = jax.random.normal(ks[0], (qlen, bsz, d_model), jnp.float32)
    r_emb = 0.1 * jax.random.normal(ks[1], (rlen, n_head, d_head), jnp.float32)
    r_w_bias = 0.1 * jax.random.normal(ks[2], (n_head, d_head), jnp.float32)
    r_bias = 0.1 * jax.random.normal(ks[3], (rlen, n_head), jnp.float32)
    wqkv = 0.1 * jax.random.normal(ks[4], (3 * n_head * d_head, d_model), jnp.float32)
    wo = 0.1 * jax.random.normal(ks[5], (d_model, n_head * d_head), jnp.float32)
    gamma = jnp.ones((d_model,), jnp.float32)   # nn.LayerNorm default init
    beta = jnp.zeros((d_model,), jnp.float32)

    out = rel_learnable_mha(w, r_emb, r_w_bias, r_bias, wqkv, wo, gamma, beta,
                            n_head, d_head)
    out = jax.block_until_ready(out)

    ref = ref_forward(w, r_emb, r_w_bias, r_bias, wqkv, wo, gamma, beta,
                      n_head, d_head)
    # Tolerance slightly relaxed vs. exact f32 to cover the EUP approximate reciprocal
    # used for the softmax denominator (per the performance review note).
    np.testing.assert_allclose(np.asarray(out), np.asarray(ref),
                               rtol=3e-3, atol=3e-3)
    print("KERNEL_OK")
</pallas_src>

<mosaic_0001>
module attributes {stable_mosaic.version = 11 : i64} {
  func.func @kernel(%arg0: i32, %arg1: memref<16x32xf32, #tpu.memory_space<vmem>>, %arg2: memref<32x96xf32, #tpu.memory_space<vmem>>, %arg3: memref<32x32xf32, #tpu.memory_space<vmem>>, %arg4: memref<2x16x16xf32, #tpu.memory_space<vmem>>, %arg5: memref<2x16xf32, #tpu.memory_space<vmem>>, %arg6: memref<2x16xf32, #tpu.memory_space<vmem>>, %arg7: memref<1x32xf32, #tpu.memory_space<vmem>>, %arg8: memref<1x32xf32, #tpu.memory_space<vmem>>, %arg9: memref<16x32xf32, #tpu.memory_space<vmem>>) attributes {dimension_semantics = [#tpu.dimension_semantics<parallel>], iteration_bounds = array<i64: 2>, scalar_prefetch = 0 : i64, scratch_operands = 0 : i64, tpu.core_type = #tpu.core_type<tc>, window_params = [{transform_indices = @transform_0, window_bounds = array<i64: 16, 32>}, {pipeline_mode = #tpu.pipeline_mode<synchronous>, transform_indices = @transform_1, window_bounds = array<i64: 32, 96>}, {pipeline_mode = #tpu.pipeline_mode<synchronous>, transform_indices = @transform_2, window_bounds = array<i64: 32, 32>}, {pipeline_mode = #tpu.pipeline_mode<synchronous>, transform_indices = @transform_3, window_bounds = array<i64: 2, 16, 16>}, {pipeline_mode = #tpu.pipeline_mode<synchronous>, transform_indices = @transform_4, window_bounds = array<i64: 2, 16>}, {pipeline_mode = #tpu.pipeline_mode<synchronous>, transform_indices = @transform_5, window_bounds = array<i64: 2, 16>}, {pipeline_mode = #tpu.pipeline_mode<synchronous>, transform_indices = @transform_6, window_bounds = array<i64: 1, 32>}, {pipeline_mode = #tpu.pipeline_mode<synchronous>, transform_indices = @transform_7, window_bounds = array<i64: 1, 32>}, {transform_indices = @transform_8, window_bounds = array<i64: 16, 32>}]} {
    %c0 = arith.constant 0 : index
    %c0_0 = arith.constant 0 : index
    %0 = vector.load %arg1[%c0, %c0_0] : memref<16x32xf32, #tpu.memory_space<vmem>>, vector<16x32xf32>
    %c0_1 = arith.constant 0 : index
    %c0_2 = arith.constant 0 : index
    %1 = vector.load %arg2[%c0_1, %c0_2] : memref<32x96xf32, #tpu.memory_space<vmem>>, vector<32x96xf32>
    %cst = arith.constant dense<0.000000e+00> : vector<16x96xf32>
    %2 = tpu.matmul %0, %1, %cst {dimension_numbers = #tpu.dot_dimension_numbers<[1], [0], [0], [1], [0, 0, 1, 1], [], []>} : vector<16x32xf32>, vector<32x96xf32>, vector<16x96xf32> -> vector<16x96xf32>
    %3 = vector.extract_strided_slice %2 {offsets = [0, 0], sizes = [16, 32], strides = [1, 1]} : vector<16x96xf32> to vector<16x32xf32>
    %cst_3 = arith.constant 2.500000e-01 : f32
    %4 = vector.broadcast %cst_3 : f32 to vector<16x32xf32>
    %5 = arith.mulf %3, %4 : vector<16x32xf32>
    %c0_4 = arith.constant 0 : index
    %c0_5 = arith.constant 0 : index
    %6 = vector.load %arg5[%c0_4, %c0_5] : memref<2x16xf32, #tpu.memory_space<vmem>>, vector<2x16xf32>
    %cst_6 = arith.constant 2.500000e-01 : f32
    %7 = vector.broadcast %cst_6 : f32 to vector<2x16xf32>
    %8 = arith.mulf %6, %7 : vector<2x16xf32>
    %c0_7 = arith.constant 0 : index
    %c0_8 = arith.constant 0 : index
    %9 = vector.load %arg6[%c0_7, %c0_8] : memref<2x16xf32, #tpu.memory_space<vmem>>, vector<2x16xf32>
    %cst_9 = arith.constant 2.500000e-01 : f32
    %10 = vector.broadcast %cst_9 : f32 to vector<2x16xf32>
    %11 = arith.mulf %9, %10 : vector<2x16xf32>
    %12 = tpu.iota {dimensions = array<i32: 0>} : vector<16x16xi32>
    %13 = tpu.iota {dimensions = array<i32: 1>} : vector<16x16xi32>
    %c1_i32 = arith.constant 1 : i32
    %14 = vector.broadcast %c1_i32 : i32 to vector<16x16xi32>
    %15 = arith.addi %12, %14 : vector<16x16xi32>
    %c16_i32 = arith.constant 16 : i32
    %16 = vector.broadcast %c16_i32 : i32 to vector<16x16xi32>
    %17 = arith.cmpi eq, %15, %16 : vector<16x16xi32>
    %c1_i32_10 = arith.constant 1 : i32
    %18 = vector.broadcast %c1_i32_10 : i32 to vector<16x16xi32>
    %19 = arith.addi %12, %18 : vector<16x16xi32>
    %c0_i32 = arith.constant 0 : i32
    %20 = vector.broadcast %c0_i32 : i32 to vector<16x16xi32>
    %21 = arith.select %17, %20, %19 : vector<16x16xi1>, vector<16x16xi32>
    %c0_i32_11 = arith.constant 0 : i32
    %22 = vector.broadcast %c0_i32_11 : i32 to vector<16x16xi32>
    %23 = arith.shrsi %21, %22 : vector<16x16xi32>
    %c1_i32_12 = arith.constant 1 : i32
    %24 = vector.broadcast %c1_i32_12 : i32 to vector<16x16xi32>
    %25 = arith.andi %23, %24 : vector<16x16xi32>
    %c1_i32_13 = arith.constant 1 : i32
    %26 = vector.broadcast %c1_i32_13 : i32 to vector<16x16xi32>
    %27 = arith.cmpi eq, %25, %26 : vector<16x16xi32>
    %c1_i32_14 = arith.constant 1 : i32
    %28 = vector.broadcast %c1_i32_14 : i32 to vector<16x16xi32>
    %29 = arith.shrsi %21, %28 : vector<16x16xi32>
    %c1_i32_15 = arith.constant 1 : i32
    %30 = vector.broadcast %c1_i32_15 : i32 to vector<16x16xi32>
    %31 = arith.andi %29, %30 : vector<16x16xi32>
    %c1_i32_16 = arith.constant 1 : i32
    %32 = vector.broadcast %c1_i32_16 : i32 to vector<16x16xi32>
    %33 = arith.cmpi eq, %31, %32 : vector<16x16xi32>
    %c2_i32 = arith.constant 2 : i32
    %34 = vector.broadcast %c2_i32 : i32 to vector<16x16xi32>
    %35 = arith.shrsi %21, %34 : vector<16x16xi32>
    %c1_i32_17 = arith.constant 1 : i32
    %36 = vector.broadcast %c1_i32_17 : i32 to vector<16x16xi32>
    %37 = arith.andi %35, %36 : vector<16x16xi32>
    %c1_i32_18 = arith.constant 1 : i32
    %38 = vector.broadcast %c1_i32_18 : i32 to vector<16x16xi32>
    %39 = arith.cmpi eq, %37, %38 : vector<16x16xi32>
    %c3_i32 = arith.constant 3 : i32
    %40 = vector.broadcast %c3_i32 : i32 to vector<16x16xi32>
    %41 = arith.shrsi %21, %40 : vector<16x16xi32>
    %c1_i32_19 = arith.constant 1 : i32
    %42 = vector.broadcast %c1_i32_19 : i32 to vector<16x16xi32>
    %43 = arith.andi %41, %42 : vector<16x16xi32>
    %c1_i32_20 = arith.constant 1 : i32
    %44 = vector.broadcast %c1_i32_20 : i32 to vector<16x16xi32>
    %45 = arith.cmpi eq, %43, %44 : vector<16x16xi32>
    %46 = arith.cmpi sle, %13, %12 : vector<16x16xi32>
    %c2_i32_21 = arith.constant 2 : i32
    %47 = vector.broadcast %c2_i32_21 : i32 to vector<16x16xi32>
    %48 = arith.addi %12, %47 : vector<16x16xi32>
    %49 = arith.cmpi sge, %13, %48 : vector<16x16xi32>
    %50 = vector.extract_strided_slice %5 {offsets = [0, 0], sizes = [16, 16], strides = [1, 1]} : vector<16x32xf32> to vector<16x16xf32>
    %51 = vector.extract_strided_slice %2 {offsets = [0, 32], sizes = [16, 16], strides = [1, 1]} : vector<16x96xf32> to vector<16x16xf32>
    %52 = vector.extract_strided_slice %2 {offsets = [0, 64], sizes = [16, 16], strides = [1, 1]} : vector<16x96xf32> to vector<16x16xf32>
    %53 = vector.extract_strided_slice %8 {offsets = [0, 0], sizes = [1, 16], strides = [1, 1]} : vector<2x16xf32> to vector<1x16xf32>
    %54 = vector.broadcast %53 : vector<1x16xf32> to vector<16x16xf32>
    %55 = arith.addf %50, %54 : vector<16x16xf32>
    %cst_22 = arith.constant dense<0.000000e+00> : vector<16x16xf32>
    %56 = tpu.matmul %55, %51, %cst_22 {dimension_numbers = #tpu.dot_dimension_numbers<[1], [1], [0], [0], [0, 0, 1, 0], [], []>} : vector<16x16xf32>, vector<16x16xf32>, vector<16x16xf32> -> vector<16x16xf32>
    %c0_23 = arith.constant 0 : index
    %c0_24 = arith.constant 0 : index
    %c0_25 = arith.constant 0 : index
    %57 = vector.load %arg4[%c0_23, %c0_24, %c0_25] : memref<2x16x16xf32, #tpu.memory_space<vmem>>, vector<1x16x16xf32>
    %58 = vector.shape_cast %57 : vector<1x16x16xf32> to vector<16x16xf32>
    %cst_26 = arith.constant dense<0.000000e+00> : vector<16x16xf32>
    %59 = tpu.matmul %50, %58, %cst_26 {dimension_numbers = #tpu.dot_dimension_numbers<[1], [1], [0], [0], [0, 0, 1, 0], [], []>} : vector<16x16xf32>, vector<16x16xf32>, vector<16x16xf32> -> vector<16x16xf32>
    %60 = vector.extract_strided_slice %11 {offsets = [0, 0], sizes = [1, 16], strides = [1, 1]} : vector<2x16xf32> to vector<1x16xf32>
    %61 = vector.broadcast %60 : vector<1x16xf32> to vector<16x16xf32>
    %62 = arith.addf %59, %61 : vector<16x16xf32>
    %63 = vector.extract_strided_slice %62 {offsets = [0, 15], sizes = [16, 1], strides = [1, 1]} : vector<16x16xf32> to vector<16x1xf32>
    %64 = vector.extract_strided_slice %62 {offsets = [0, 0], sizes = [16, 15], strides = [1, 1]} : vector<16x16xf32> to vector<16x15xf32>
    %65 = tpu.concatenate %63, %64 in 1 : vector<16x1xf32>, vector<16x15xf32> -> vector<16x16xf32>
    %66 = arith.select %27, %65, %62 : vector<16x16xi1>, vector<16x16xf32>
    %67 = vector.extract_strided_slice %66 {offsets = [0, 14], sizes = [16, 2], strides = [1, 1]} : vector<16x16xf32> to vector<16x2xf32>
    %68 = vector.extract_strided_slice %66 {offsets = [0, 0], sizes = [16, 14], strides = [1, 1]} : vector<16x16xf32> to vector<16x14xf32>
    %69 = tpu.concatenate %67, %68 in 1 : vector<16x2xf32>, vector<16x14xf32> -> vector<16x16xf32>
    %70 = arith.select %33, %69, %66 : vector<16x16xi1>, vector<16x16xf32>
    %71 = vector.extract_strided_slice %70 {offsets = [0, 12], sizes = [16, 4], strides = [1, 1]} : vector<16x16xf32> to vector<16x4xf32>
    %72 = vector.extract_strided_slice %70 {offsets = [0, 0], sizes = [16, 12], strides = [1, 1]} : vector<16x16xf32> to vector<16x12xf32>
    %73 = tpu.concatenate %71, %72 in 1 : vector<16x4xf32>, vector<16x12xf32> -> vector<16x16xf32>
    %74 = arith.select %39, %73, %70 : vector<16x16xi1>, vector<16x16xf32>
    %75 = vector.extract_strided_slice %74 {offsets = [0, 8], sizes = [16, 8], strides = [1, 1]} : vector<16x16xf32> to vector<16x8xf32>
    %76 = vector.extract_strided_slice %74 {offsets = [0, 0], sizes = [16, 8], strides = [1, 1]} : vector<16x16xf32> to vector<16x8xf32>
    %77 = tpu.concatenate %75, %76 in 1 : vector<16x8xf32>, vector<16x8xf32> -> vector<16x16xf32>
    %78 = arith.select %45, %77, %74 : vector<16x16xi1>, vector<16x16xf32>
    %79 = vector.extract_strided_slice %78 {offsets = [1, 0], sizes = [15, 16], strides = [1, 1]} : vector<16x16xf32> to vector<15x16xf32>
    %80 = vector.extract_strided_slice %78 {offsets = [0, 0], sizes = [1, 16], strides = [1, 1]} : vector<16x16xf32> to vector<1x16xf32>
    %81 = tpu.concatenate %79, %80 in 0 : vector<15x16xf32>, vector<1x16xf32> -> vector<16x16xf32>
    %cst_27 = arith.constant 0.000000e+00 : f32
    %82 = vector.broadcast %cst_27 : f32 to vector<16x16xf32>
    %83 = arith.select %46, %78, %82 : vector<16x16xi1>, vector<16x16xf32>
    %cst_28 = arith.constant 0.000000e+00 : f32
    %84 = vector.broadcast %cst_28 : f32 to vector<16x16xf32>
    %85 = arith.select %49, %81, %84 : vector<16x16xi1>, vector<16x16xf32>
    %86 = arith.addf %83, %85 : vector<16x16xf32>
    %87 = arith.addf %56, %86 : vector<16x16xf32>
    %cst_29 = arith.constant dense<0xFF800000> : vector<16xf32>
    %88 = vector.multi_reduction <maximumf>, %87, %cst_29 [1] : vector<16x16xf32> to vector<16xf32>
    %89 = vector.shape_cast %88 : vector<16xf32> to vector<16x1xf32>
    %90 = vector.broadcast %89 : vector<16x1xf32> to vector<16x16xf32>
    %91 = arith.subf %87, %90 : vector<16x16xf32>
    %92 = math.exp %91 : vector<16x16xf32>
    %cst_30 = arith.constant dense<0.000000e+00> : vector<16xf32>
    %93 = vector.multi_reduction <add>, %92, %cst_30 [1] : vector<16x16xf32> to vector<16xf32>
    %94 = vector.shape_cast %93 : vector<16xf32> to vector<16x1xf32>
    %95 = tpu.reciprocal %94 {approx = true} : vector<16x1xf32> -> vector<16x1xf32>
    %96 = vector.broadcast %95 : vector<16x1xf32> to vector<16x16xf32>
    %97 = arith.mulf %92, %96 : vector<16x16xf32>
    %cst_31 = arith.constant dense<0.000000e+00> : vector<16x16xf32>
    %98 = tpu.matmul %97, %52, %cst_31 {dimension_numbers = #tpu.dot_dimension_numbers<[1], [0], [0], [1], [0, 0, 1, 1], [], []>} : vector<16x16xf32>, vector<16x16xf32>, vector<16x16xf32> -> vector<16x16xf32>
    %c0_32 = arith.constant 0 : index
    %c0_33 = arith.constant 0 : index
    %99 = vector.load %arg3[%c0_32, %c0_33] : memref<32x32xf32, #tpu.memory_space<vmem>>, vector<16x32xf32>
    %cst_34 = arith.constant dense<0.000000e+00> : vector<16x32xf32>
    %100 = tpu.matmul %98, %99, %cst_34 {dimension_numbers = #tpu.dot_dimension_numbers<[1], [0], [0], [1], [0, 0, 1, 1], [], []>} : vector<16x16xf32>, vector<16x32xf32>, vector<16x32xf32> -> vector<16x32xf32>
    %101 = vector.extract_strided_slice %5 {offsets = [0, 16], sizes = [16, 16], strides = [1, 1]} : vector<16x32xf32> to vector<16x16xf32>
    %102 = vector.extract_strided_slice %2 {offsets = [0, 48], sizes = [16, 16], strides = [1, 1]} : vector<16x96xf32> to vector<16x16xf32>
    %103 = vector.extract_strided_slice %2 {offsets = [0, 80], sizes = [16, 16], strides = [1, 1]} : vector<16x96xf32> to vector<16x16xf32>
    %104 = vector.extract_strided_slice %8 {offsets = [1, 0], sizes = [1, 16], strides = [1, 1]} : vector<2x16xf32> to vector<1x16xf32>
    %105 = vector.broadcast %104 : vector<1x16xf32> to vector<16x16xf32>
    %106 = arith.addf %101, %105 : vector<16x16xf32>
    %cst_35 = arith.constant dense<0.000000e+00> : vector<16x16xf32>
    %107 = tpu.matmul %106, %102, %cst_35 {dimension_numbers = #tpu.dot_dimension_numbers<[1], [1], [0], [0], [0, 0, 1, 0], [], []>} : vector<16x16xf32>, vector<16x16xf32>, vector<16x16xf32> -> vector<16x16xf32>
    %c1 = arith.constant 1 : index
    %c0_36 = arith.constant 0 : index
    %c0_37 = arith.constant 0 : index
    %108 = vector.load %arg4[%c1, %c0_36, %c0_37] : memref<2x16x16xf32, #tpu.memory_space<vmem>>, vector<1x16x16xf32>
    %109 = vector.shape_cast %108 : vector<1x16x16xf32> to vector<16x16xf32>
    %cst_38 = arith.constant dense<0.000000e+00> : vector<16x16xf32>
    %110 = tpu.matmul %101, %109, %cst_38 {dimension_numbers = #tpu.dot_dimension_numbers<[1], [1], [0], [0], [0, 0, 1, 0], [], []>} : vector<16x16xf32>, vector<16x16xf32>, vector<16x16xf32> -> vector<16x16xf32>
    %111 = vector.extract_strided_slice %11 {offsets = [1, 0], sizes = [1, 16], strides = [1, 1]} : vector<2x16xf32> to vector<1x16xf32>
    %112 = vector.broadcast %111 : vector<1x16xf32> to vector<16x16xf32>
    %113 = arith.addf %110, %112 : vector<16x16xf32>
    %114 = vector.extract_strided_slice %113 {offsets = [0, 15], sizes = [16, 1], strides = [1, 1]} : vector<16x16xf32> to vector<16x1xf32>
    %115 = vector.extract_strided_slice %113 {offsets = [0, 0], sizes = [16, 15], strides = [1, 1]} : vector<16x16xf32> to vector<16x15xf32>
    %116 = tpu.concatenate %114, %115 in 1 : vector<16x1xf32>, vector<16x15xf32> -> vector<16x16xf32>
    %117 = arith.select %27, %116, %113 : vector<16x16xi1>, vector<16x16xf32>
    %118 = vector.extract_strided_slice %117 {offsets = [0, 14], sizes = [16, 2], strides = [1, 1]} : vector<16x16xf32> to vector<16x2xf32>
    %119 = vector.extract_strided_slice %117 {offsets = [0, 0], sizes = [16, 14], strides = [1, 1]} : vector<16x16xf32> to vector<16x14xf32>
    %120 = tpu.concatenate %118, %119 in 1 : vector<16x2xf32>, vector<16x14xf32> -> vector<16x16xf32>
    %121 = arith.select %33, %120, %117 : vector<16x16xi1>, vector<16x16xf32>
    %122 = vector.extract_strided_slice %121 {offsets = [0, 12], sizes = [16, 4], strides = [1, 1]} : vector<16x16xf32> to vector<16x4xf32>
    %123 = vector.extract_strided_slice %121 {offsets = [0, 0], sizes = [16, 12], strides = [1, 1]} : vector<16x16xf32> to vector<16x12xf32>
    %124 = tpu.concatenate %122, %123 in 1 : vector<16x4xf32>, vector<16x12xf32> -> vector<16x16xf32>
    %125 = arith.select %39, %124, %121 : vector<16x16xi1>, vector<16x16xf32>
    %126 = vector.extract_strided_slice %125 {offsets = [0, 8], sizes = [16, 8], strides = [1, 1]} : vector<16x16xf32> to vector<16x8xf32>
    %127 = vector.extract_strided_slice %125 {offsets = [0, 0], sizes = [16, 8], strides = [1, 1]} : vector<16x16xf32> to vector<16x8xf32>
    %128 = tpu.concatenate %126, %127 in 1 : vector<16x8xf32>, vector<16x8xf32> -> vector<16x16xf32>
    %129 = arith.select %45, %128, %125 : vector<16x16xi1>, vector<16x16xf32>
    %130 = vector.extract_strided_slice %129 {offsets = [1, 0], sizes = [15, 16], strides = [1, 1]} : vector<16x16xf32> to vector<15x16xf32>
    %131 = vector.extract_strided_slice %129 {offsets = [0, 0], sizes = [1, 16], strides = [1, 1]} : vector<16x16xf32> to vector<1x16xf32>
    %132 = tpu.concatenate %130, %131 in 0 : vector<15x16xf32>, vector<1x16xf32> -> vector<16x16xf32>
    %cst_39 = arith.constant 0.000000e+00 : f32
    %133 = vector.broadcast %cst_39 : f32 to vector<16x16xf32>
    %134 = arith.select %46, %129, %133 : vector<16x16xi1>, vector<16x16xf32>
    %cst_40 = arith.constant 0.000000e+00 : f32
    %135 = vector.broadcast %cst_40 : f32 to vector<16x16xf32>
    %136 = arith.select %49, %132, %135 : vector<16x16xi1>, vector<16x16xf32>
    %137 = arith.addf %134, %136 : vector<16x16xf32>
    %138 = arith.addf %107, %137 : vector<16x16xf32>
    %cst_41 = arith.constant dense<0xFF800000> : vector<16xf32>
    %139 = vector.multi_reduction <maximumf>, %138, %cst_41 [1] : vector<16x16xf32> to vector<16xf32>
    %140 = vector.shape_cast %139 : vector<16xf32> to vector<16x1xf32>
    %141 = vector.broadcast %140 : vector<16x1xf32> to vector<16x16xf32>
    %142 = arith.subf %138, %141 : vector<16x16xf32>
    %143 = math.exp %142 : vector<16x16xf32>
    %cst_42 = arith.constant dense<0.000000e+00> : vector<16xf32>
    %144 = vector.multi_reduction <add>, %143, %cst_42 [1] : vector<16x16xf32> to vector<16xf32>
    %145 = vector.shape_cast %144 : vector<16xf32> to vector<16x1xf32>
    %146 = tpu.reciprocal %145 {approx = true} : vector<16x1xf32> -> vector<16x1xf32>
    %147 = vector.broadcast %146 : vector<16x1xf32> to vector<16x16xf32>
    %148 = arith.mulf %143, %147 : vector<16x16xf32>
    %cst_43 = arith.constant dense<0.000000e+00> : vector<16x16xf32>
    %149 = tpu.matmul %148, %103, %cst_43 {dimension_numbers = #tpu.dot_dimension_numbers<[1], [0], [0], [1], [0, 0, 1, 1], [], []>} : vector<16x16xf32>, vector<16x16xf32>, vector<16x16xf32> -> vector<16x16xf32>
    %c16 = arith.constant 16 : index
    %c0_44 = arith.constant 0 : index
    %150 = vector.load %arg3[%c16, %c0_44] : memref<32x32xf32, #tpu.memory_space<vmem>>, vector<16x32xf32>
    %cst_45 = arith.constant dense<0.000000e+00> : vector<16x32xf32>
    %151 = tpu.matmul %149, %150, %cst_45 {dimension_numbers = #tpu.dot_dimension_numbers<[1], [0], [0], [1], [0, 0, 1, 1], [], []>} : vector<16x16xf32>, vector<16x32xf32>, vector<16x32xf32> -> vector<16x32xf32>
    %152 = arith.addf %100, %151 : vector<16x32xf32>
    %153 = arith.addf %0, %152 : vector<16x32xf32>
    %cst_46 = arith.constant dense<0.000000e+00> : vector<16xf32>
    %154 = vector.multi_reduction <add>, %153, %cst_46 [1] : vector<16x32xf32> to vector<16xf32>
    %155 = vector.shape_cast %154 : vector<16xf32> to vector<16x1xf32>
    %cst_47 = arith.constant 3.200000e+01 : f32
    %156 = vector.broadcast %cst_47 : f32 to vector<16x1xf32>
    %157 = arith.divf %155, %156 : vector<16x1xf32>
    %158 = vector.broadcast %157 : vector<16x1xf32> to vector<16x32xf32>
    %159 = arith.subf %153, %158 : vector<16x32xf32>
    %160 = arith.mulf %159, %159 : vector<16x32xf32>
    %cst_48 = arith.constant dense<0.000000e+00> : vector<16xf32>
    %161 = vector.multi_reduction <add>, %160, %cst_48 [1] : vector<16x32xf32> to vector<16xf32>
    %162 = vector.shape_cast %161 : vector<16xf32> to vector<16x1xf32>
    %cst_49 = arith.constant 3.200000e+01 : f32
    %163 = vector.broadcast %cst_49 : f32 to vector<16x1xf32>
    %164 = arith.divf %162, %163 : vector<16x1xf32>
    %165 = vector.broadcast %157 : vector<16x1xf32> to vector<16x32xf32>
    %166 = arith.subf %153, %165 : vector<16x32xf32>
    %cst_50 = arith.constant 9.99999974E-6 : f32
    %167 = vector.broadcast %cst_50 : f32 to vector<16x1xf32>
    %168 = arith.addf %164, %167 : vector<16x1xf32>
    %169 = math.rsqrt %168 : vector<16x1xf32>
    %170 = vector.broadcast %169 : vector<16x1xf32> to vector<16x32xf32>
    %171 = arith.mulf %166, %170 : vector<16x32xf32>
    %c0_51 = arith.constant 0 : index
    %c0_52 = arith.constant 0 : index
    %172 = vector.load %arg7[%c0_51, %c0_52] : memref<1x32xf32, #tpu.memory_space<vmem>>, vector<1x32xf32>
    %173 = vector.broadcast %172 : vector<1x32xf32> to vector<16x32xf32>
    %174 = arith.mulf %171, %173 : vector<16x32xf32>
    %c0_53 = arith.constant 0 : index
    %c0_54 = arith.constant 0 : index
    %175 = vector.load %arg8[%c0_53, %c0_54] : memref<1x32xf32, #tpu.memory_space<vmem>>, vector<1x32xf32>
    %176 = vector.broadcast %175 : vector<1x32xf32> to vector<16x32xf32>
    %177 = arith.addf %174, %176 : vector<16x32xf32>
    %c0_55 = arith.constant 0 : index
    %c0_56 = arith.constant 0 : index
    %178 = vector.load %arg9[%c0_55, %c0_56] : memref<16x32xf32, #tpu.memory_space<vmem>>, vector<16x32xf32>
    tpu.vector_store %arg9[%c0_55, %c0_56], %177 {strides = array<i32>} : memref<16x32xf32, #tpu.memory_space<vmem>>, vector<16x32xf32>,
    return
  }
  func.func @transform_0(%arg0: i32) -> (i32, i32) {
    %c0_i32 = arith.constant 0 : i32
    %c0_i32_0 = arith.constant 0 : i32
    return %arg0, %c0_i32 : i32, i32
  }
  func.func @transform_1(%arg0: i32) -> (i32, i32) {
    %c0_i32 = arith.constant 0 : i32
    %c0_i32_0 = arith.constant 0 : i32
    %c0_i32_1 = arith.constant 0 : i32
    return %c0_i32, %c0_i32_0 : i32, i32
  }
  func.func @transform_2(%arg0: i32) -> (i32, i32) {
    %c0_i32 = arith.constant 0 : i32
    %c0_i32_0 = arith.constant 0 : i32
    %c0_i32_1 = arith.constant 0 : i32
    return %c0_i32, %c0_i32_0 : i32, i32
  }
  func.func @transform_3(%arg0: i32) -> (i32, i32, i32) {
    %c0_i32 = arith.constant 0 : i32
    %c0_i32_0 = arith.constant 0 : i32
    %c0_i32_1 = arith.constant 0 : i32
    %c0_i32_2 = arith.constant 0 : i32
    return %c0_i32, %c0_i32_0, %c0_i32_1 : i32, i32, i32
  }
  func.func @transform_4(%arg0: i32) -> (i32, i32) {
    %c0_i32 = arith.constant 0 : i32
    %c0_i32_0 = arith.constant 0 : i32
    %c0_i32_1 = arith.constant 0 : i32
    return %c0_i32, %c0_i32_0 : i32, i32
  }
  func.func @transform_5(%arg0: i32) -> (i32, i32) {
    %c0_i32 = arith.constant 0 : i32
    %c0_i32_0 = arith.constant 0 : i32
    %c0_i32_1 = arith.constant 0 : i32
    return %c0_i32, %c0_i32_0 : i32, i32
  }
  func.func @transform_6(%arg0: i32) -> (i32, i32) {
    %c0_i32 = arith.constant 0 : i32
    %c0_i32_0 = arith.constant 0 : i32
    %c0_i32_1 = arith.constant 0 : i32
    return %c0_i32, %c0_i32_0 : i32, i32
  }
  func.func @transform_7(%arg0: i32) -> (i32, i32) {
    %c0_i32 = arith.constant 0 : i32
    %c0_i32_0 = arith.constant 0 : i32
    %c0_i32_1 = arith.constant 0 : i32
    return %c0_i32, %c0_i32_0 : i32, i32
  }
  func.func @transform_8(%arg0: i32) -> (i32, i32) {
    %c0_i32 = arith.constant 0 : i32
    %c0_i32_0 = arith.constant 0 : i32
    return %arg0, %c0_i32 : i32, i32
  }
}

</mosaic_0001>

<llo_original>
// kernel: tpu_custom_call.1
$region0: #{tpu_custom_call.1}
  #allocation0 [shape = 'u32[]', space=smem, size = 0x4, offset = 0x4, fixed_abs, tag = 'smem constant byte address 0x4 - core index']
  #allocation1 [shape = 'u32[144,128]{1,0:T(1,128)}', space=vmem, size = 0x12000, scoped, tag = 'internal scratch']
  %s0 = inlined_call_operand.hbm [shape: f32[32,32], index: 0, kind: input, shape index: {}]
  %s1 = inlined_call_operand.hbm [shape: f32[32,96], index: 1, kind: input, shape index: {}]
  %s2 = inlined_call_operand.hbm [shape: f32[32,32], index: 2, kind: input, shape index: {}]
  %s3 = inlined_call_operand.hbm [shape: f32[2,16,16], index: 3, kind: input, shape index: {}]
  %s4 = inlined_call_operand.vmem [shape: f32[2,16], index: 4, kind: input, shape index: {}]
  %s5 = inlined_call_operand.vmem [shape: f32[2,16], index: 5, kind: input, shape index: {}]
  %s6 = inlined_call_operand.vmem [shape: f32[1,32], index: 6, kind: input, shape index: {}]
  %s7 = inlined_call_operand.vmem [shape: f32[1,32], index: 7, kind: input, shape index: {}]
  %s8 = inlined_call_operand.hbm [shape: f32[32,32], index: 8, kind: output, shape index: {}]
  %s9 = sld [smem:[#allocation0]]
  $region81: #{tpu_custom_call.1} parent=0
    _
  %s11 = ssub.s32 1, %s9
  %s12 = scalar_select 0, %s11, %s9
  $region1: #{tpu_custom_call.1} parent=0
    #allocation2 [shape = 'u8[16384]{0}', space=vmem, size = 0x4000, scoped, tag = 'input window, operand 0']
    #allocation3 [shape = 's32[2]{0}', space=sflag, size = 0x8, scoped, tag = 'scoped memory for tpu_custom_call.1']
    #allocation4 [shape = 's32[2]{0}', space=sflag, size = 0x8, scoped, tag = 'scoped memory for tpu_custom_call.1']
    #allocation5 [shape = 'u8[16384]{0}', space=vmem, size = 0x4000, scoped, tag = 'input window, operand 1, single buffered']
    #allocation6 [shape = 's32[1]{0}', space=sflag, size = 0x4, scoped, tag = 'scoped memory for tpu_custom_call.1']
    #allocation7 [shape = 'u8[16384]{0}', space=vmem, size = 0x4000, scoped, tag = 'input window, operand 2, single buffered']
    #allocation8 [shape = 'u8[16384]{0}', space=vmem, size = 0x4000, scoped, tag = 'input window, operand 3, single buffered']
    #allocation9 [shape = 's32[1]{0}', space=sflag, size = 0x4, scoped, tag = 'scoped memory for tpu_custom_call.1']
    #allocation10 [shape = 'u8[16384]{0}', space=vmem, size = 0x4000, scoped, tag = 'output window, operand 0']
    %13 = vsyncpa [#allocation3], 0
    %s14 = scalar_lea.sflag [#allocation3], 1
    %15 = vsyncpa %s14, 0
    %16 = vsyncpa [#allocation6], 0
    %17 = vsyncpa [#allocation9], 0
    %18 = vsyncpa [#allocation4], 0
    %s19 = scalar_lea.sflag [#allocation4], 1
    %20 = vsyncpa %s19, 0
    loop: start=0, step=1, limit=4
    $region2: #{tpu_custom_call.1} parent=1 // loop_pre_header
      _
    $region3: #{tpu_custom_call.1} parent=1 // loop_header
      %s22 = sphi 0, %s26
      %p23 = scmp.ge.s32.totalorder %s22, 4
      %s32 = sphi 0, %s34
      %s35 = sphi 0, %s32
      %s36 = sphi 0, %s35
      %s52 = sphi 0, %s36
      %s56 = sphi 0, %s56
      %s58 = sphi 0, %s56
      %s59 = sphi 0, %s58
      %s73 = sphi 0, %s59
      %s77 = sphi 0, %s77
      %s79 = sphi 0, %s77
      %s80 = sphi 0, %s79
      %s94 = sphi 0, %s80
      %s98 = sphi 0, %s98
      %s100 = sphi 0, %s98
      %s101 = sphi 0, %s100
      %s115 = sphi 0, %s101
      %s119 = sphi 0, %s119
      %s121 = sphi 0, %s119
      %s122 = sphi 0, %s121
      %s136 = sphi 0, %s122
      %s140 = sphi 0, %s140
      %s142 = sphi 0, %s140
      %s143 = sphi 0, %s142
      %s157 = sphi 0, %s143
      %s161 = sphi 0, %s161
      %s163 = sphi 0, %s161
      %s164 = sphi 0, %s163
      %s178 = sphi 0, %s164
      %s182 = sphi 0, %s182
      %s184 = sphi 0, %s182
      %s185 = sphi 0, %s184
      %s199 = sphi 0, %s185
      %s205 = sphi 0, %s207
      %s208 = sphi 0, %s205
      %s209 = sphi 0, %s208
      %s225 = sphi 0, %s209
    $region4: #{tpu_custom_call.1} parent=1 // loop_header_branch
      %25 = sbr.rel (%p23) target = $region8
    $region5: #{tpu_custom_call.1} parent=1 // loop_body
      %s27 = ssub.s32 %s22, 1
      %s28 = ssub.s32 %s22, 2
      %s29 = sadd.s32 %s22, 1
      %s30 = ssub.s32 %s22, %s29
      %p31 = scmp.eq.s32.totalorder %s30, 0
      %s33 = sadd.s32 %s32, 1
      %s34 = scalar_select %p31, %s32, %s33
      %p37 = pneg %p31
      %p38 = scmp.eq.s32.totalorder %s22, 1
      %p39 = por %p37, %p38
      %p40 = scmp.ne.s32.totalorder %s32, %s35
      %p41 = scmp.eq.s32.totalorder %s22, 0
      %p42 = por %p40, %p41
      %p43 = scmp.ne.s32.totalorder %s32, %s35
      %p44 = scmp.eq.s32.totalorder %s27, 1
      %p45 = por %p43, %p44
      %p46 = scmp.ne.s32.totalorder %s35, %s36
      %p47 = scmp.eq.s32.totalorder %s27, 0
      %p48 = por %p46, %p47
      %p49 = scmp.ne.s32.totalorder %s35, %s36
      %p50 = scmp.eq.s32.totalorder %s28, 1
      %p51 = por %p49, %p50
      %p53 = scmp.ne.s32.totalorder %s36, %s52
      %p54 = scmp.eq.s32.totalorder %s28, 0
      %p55 = por %p53, %p54
      %s57 = sadd.s32 %s56, 1
      %p60 = scmp.eq.s32.totalorder %s22, 1
      %p61 = scmp.ne.s32.totalorder %s56, %s58
      %p62 = scmp.eq.s32.totalorder %s22, 0
      %p63 = por %p61, %p62
      %p64 = scmp.ne.s32.totalorder %s56, %s58
      %p65 = scmp.eq.s32.totalorder %s27, 1
      %p66 = por %p64, %p65
      %p67 = scmp.ne.s32.totalorder %s58, %s59
      %p68 = scmp.eq.s32.totalorder %s27, 0
      %p69 = por %p67, %p68
      %p70 = scmp.ne.s32.totalorder %s58, %s59
      %p71 = scmp.eq.s32.totalorder %s28, 1
      %p72 = por %p70, %p71
      %p74 = scmp.ne.s32.totalorder %s59, %s73
      %p75 = scmp.eq.s32.totalorder %s28, 0
      %p76 = por %p74, %p75
      %s78 = sadd.s32 %s77, 1
      %p81 = scmp.eq.s32.totalorder %s22, 1
      %p82 = scmp.ne.s32.totalorder %s77, %s79
      %p83 = scmp.eq.s32.totalorder %s22, 0
      %p84 = por %p82, %p83
      %p85 = scmp.ne.s32.totalorder %s77, %s79
      %p86 = scmp.eq.s32.totalorder %s27, 1
      %p87 = por %p85, %p86
      %p88 = scmp.ne.s32.totalorder %s79, %s80
      %p89 = scmp.eq.s32.totalorder %s27, 0
      %p90 = por %p88, %p89
      %p91 = scmp.ne.s32.totalorder %s79, %s80
      %p92 = scmp.eq.s32.totalorder %s28, 1
      %p93 = por %p91, %p92
      %p95 = scmp.ne.s32.totalorder %s80, %s94
      %p96 = scmp.eq.s32.totalorder %s28, 0
      %p97 = por %p95, %p96
      %s99 = sadd.s32 %s98, 1
      %p102 = scmp.eq.s32.totalorder %s22, 1
      %p103 = scmp.ne.s32.totalorder %s98, %s100
      %p104 = scmp.eq.s32.totalorder %s22, 0
      %p105 = por %p103, %p104
      %p106 = scmp.ne.s32.totalorder %s98, %s100
      %p107 = scmp.eq.s32.totalorder %s27, 1
      %p108 = por %p106, %p107
      %p109 = scmp.ne.s32.totalorder %s100, %s101
      %p110 = scmp.eq.s32.totalorder %s27, 0
      %p111 = por %p109, %p110
      %p112 = scmp.ne.s32.totalorder %s100, %s101
      %p113 = scmp.eq.s32.totalorder %s28, 1
      %p114 = por %p112, %p113
      %p116 = scmp.ne.s32.totalorder %s101, %s115
      %p117 = scmp.eq.s32.totalorder %s28, 0
      %p118 = por %p116, %p117
      %s120 = sadd.s32 %s119, 1
      %p123 = scmp.eq.s32.totalorder %s22, 1
      %p124 = scmp.ne.s32.totalorder %s119, %s121
      %p125 = scmp.eq.s32.totalorder %s22, 0
      %p126 = por %p124, %p125
      %p127 = scmp.ne.s32.totalorder %s119, %s121
      %p128 = scmp.eq.s32.totalorder %s27, 1
      %p129 = por %p127, %p128
      %p130 = scmp.ne.s32.totalorder %s121, %s122
      %p131 = scmp.eq.s32.totalorder %s27, 0
      %p132 = por %p130, %p131
      %p133 = scmp.ne.s32.totalorder %s121, %s122
      %p134 = scmp.eq.s32.totalorder %s28, 1
      %p135 = por %p133, %p134
      %p137 = scmp.ne.s32.totalorder %s122, %s136
      %p138 = scmp.eq.s32.totalorder %s28, 0
      %p139 = por %p137, %p138
      %s141 = sadd.s32 %s140, 1
      %p144 = scmp.eq.s32.totalorder %s22, 1
      %p145 = scmp.ne.s32.totalorder %s140, %s142
      %p146 = scmp.eq.s32.totalorder %s22, 0
      %p147 = por %p145, %p146
      %p148 = scmp.ne.s32.totalorder %s140, %s142
      %p149 = scmp.eq.s32.totalorder %s27, 1
      %p150 = por %p148, %p149
      %p151 = scmp.ne.s32.totalorder %s142, %s143
      %p152 = scmp.eq.s32.totalorder %s27, 0
      %p153 = por %p151, %p152
      %p154 = scmp.ne.s32.totalorder %s142, %s143
      %p155 = scmp.eq.s32.totalorder %s28, 1
      %p156 = por %p154, %p155
      %p158 = scmp.ne.s32.totalorder %s143, %s157
      %p159 = scmp.eq.s32.totalorder %s28, 0
      %p160 = por %p158, %p159
      %s162 = sadd.s32 %s161, 1
      %p165 = scmp.eq.s32.totalorder %s22, 1
      %p166 = scmp.ne.s32.totalorder %s161, %s163
      %p167 = scmp.eq.s32.totalorder %s22, 0
      %p168 = por %p166, %p167
      %p169 = scmp.ne.s32.totalorder %s161, %s163
      %p170 = scmp.eq.s32.totalorder %s27, 1
      %p171 = por %p169, %p170
      %p172 = scmp.ne.s32.totalorder %s163, %s164
      %p173 = scmp.eq.s32.totalorder %s27, 0
      %p174 = por %p172, %p173
      %p175 = scmp.ne.s32.totalorder %s163, %s164
      %p176 = scmp.eq.s32.totalorder %s28, 1
      %p177 = por %p175, %p176
      %p179 = scmp.ne.s32.totalorder %s164, %s178
      %p180 = scmp.eq.s32.totalorder %s28, 0
      %p181 = por %p179, %p180
      %s183 = sadd.s32 %s182, 1
      %p186 = scmp.eq.s32.totalorder %s22, 1
      %p187 = scmp.ne.s32.totalorder %s182, %s184
      %p188 = scmp.eq.s32.totalorder %s22, 0
      %p189 = por %p187, %p188
      %p190 = scmp.ne.s32.totalorder %s182, %s184
      %p191 = scmp.eq.s32.totalorder %s27, 1
      %p192 = por %p190, %p191
      %p193 = scmp.ne.s32.totalorder %s184, %s185
      %p194 = scmp.eq.s32.totalorder %s27, 0
      %p195 = por %p193, %p194
      %p196 = scmp.ne.s32.totalorder %s184, %s185
      %p197 = scmp.eq.s32.totalorder %s28, 1
      %p198 = por %p196, %p197
      %p200 = scmp.ne.s32.totalorder %s185, %s199
      %p201 = scmp.eq.s32.totalorder %s28, 0
      %p202 = por %p200, %p201
      %s203 = ssub.s32 %s22, %s29
      %p204 = scmp.eq.s32.totalorder %s203, 0
      %s206 = sadd.s32 %s205, 1
      %s207 = scalar_select %p204, %s205, %s206
      %p210 = pneg %p204
      %p211 = scmp.eq.s32.totalorder %s22, 1
      %p212 = por %p210, %p211
      %p213 = scmp.ne.s32.totalorder %s205, %s208
      %p214 = scmp.eq.s32.totalorder %s22, 0
      %p215 = por %p213, %p214
      %p216 = scmp.ne.s32.totalorder %s205, %s208
      %p217 = scmp.eq.s32.totalorder %s27, 1
      %p218 = por %p216, %p217
      %p219 = scmp.ne.s32.totalorder %s208, %s209
      %p220 = scmp.eq.s32.totalorder %s27, 0
      %p221 = por %p219, %p220
      %p222 = scmp.ne.s32.totalorder %s208, %s209
      %p223 = scmp.eq.s32.totalorder %s28, 1
      %p224 = por %p222, %p223
      %p226 = scmp.ne.s32.totalorder %s209, %s225
      %p227 = scmp.eq.s32.totalorder %s28, 0
      %p228 = por %p226, %p227
      %p229 = scmp.le.s32.totalorder 1, %s22
      %p230 = scmp.lt.s32.totalorder %s22, 3
      %p231 = pnand %p229, %p230
      %p232 = pneg %p231
      // Predicated region
      $region9: #{tpu_custom_call.1} parent=5 // pred_check
        _
      $region10: #{tpu_custom_call.1} parent=5 // pred_check_branch
        %234 = sbr.rel (%p231) target = $region12
      $region11: #{tpu_custom_call.1} parent=5 // pred_region
        %s235 = ssub.s32 %s22, 1
        // Predicated region
        $region13: #{tpu_custom_call.1} parent=11 // pred_check
          %p236 = pneg %p69
        $region14: #{tpu_custom_call.1} parent=11 // pred_check_branch
          %238 = sbr.rel (%p236) target = $region16
        $region15: #{tpu_custom_call.1} parent=11 // pred_region
          %s240 = ssub.s32 512, 512
          %241 = vsyncadd [#allocation6], %s240
          %s242 = sshll.u32 [#allocation5], 4
          %s243 = int_to_ptr.vmem [resolvable:$true] %s242
          %248 = dma.hbm_to_vmem [thread:$0]  %s1, 512, %s243, [#allocation6], 128, 128, 8
        $region16: #{tpu_custom_call.1} parent=11 // pred_fallthru
          _
        // Predicated region
        $region17: #{tpu_custom_call.1} parent=11 // pred_check
          %p249 = pneg %p90
        $region18: #{tpu_custom_call.1} parent=11 // pred_check_branch
          %251 = sbr.rel (%p249) target = $region20
        $region19: #{tpu_custom_call.1} parent=11 // pred_region
          %s253 = ssub.s32 512, 512
          %254 = vsyncadd [#allocation6], %s253
          %s255 = sshll.u32 [#allocation7], 4
          %s256 = int_to_ptr.vmem [resolvable:$true] %s255
          %261 = dma.hbm_to_vmem [thread:$0]  %s2, 512, %s256, [#allocation6], 128, 128, 8
        $region20: #{tpu_custom_call.1} parent=11 // pred_fallthru
          _
        // Predicated region
        $region21: #{tpu_custom_call.1} parent=11 // pred_check
          %p262 = pneg %p111
        $region22: #{tpu_custom_call.1} parent=11 // pred_check_branch
          %264 = sbr.rel (%p262) target = $region24
        $region23: #{tpu_custom_call.1} parent=11 // pred_region
          %s266 = ssub.s32 512, 512
          %267 = vsyncadd [#allocation9], %s266
          %s268 = sshll.u32 [#allocation8], 4
          %s269 = int_to_ptr.vmem [resolvable:$true] %s268
          %274 = dma.hbm_to_vmem [thread:$0]  %s3, 512, %s269, [#allocation9], 128, 128, 8
        $region24: #{tpu_custom_call.1} parent=11 // pred_fallthru
          _
        // Predicated region
        $region25: #{tpu_custom_call.1} parent=11 // pred_check
          %p275 = pneg %p132
        $region26: #{tpu_custom_call.1} parent=11 // pred_check_branch
          %277 = sbr.rel (%p275) target = $region28
        $region27: #{tpu_custom_call.1} parent=11 // pred_region
          _
        $region28: #{tpu_custom_call.1} parent=11 // pred_fallthru
          _
        // Predicated region
        $region29: #{tpu_custom_call.1} parent=11 // pred_check
          %p278 = pneg %p153
        $region30: #{tpu_custom_call.1} parent=11 // pred_check_branch
          %280 = sbr.rel (%p278) target = $region32
        $region31: #{tpu_custom_call.1} parent=11 // pred_region
          _
        $region32: #{tpu_custom_call.1} parent=11 // pred_fallthru
          _
        // Predicated region
        $region33: #{tpu_custom_call.1} parent=11 // pred_check
          %p281 = pneg %p174
        $region34: #{tpu_custom_call.1} parent=11 // pred_check_branch
          %283 = sbr.rel (%p281) target = $region36
        $region35: #{tpu_custom_call.1} parent=11 // pred_region
          _
        $region36: #{tpu_custom_call.1} parent=11 // pred_fallthru
          _
        // Predicated region
        $region37: #{tpu_custom_call.1} parent=11 // pred_check
          %p284 = pneg %p195
        $region38: #{tpu_custom_call.1} parent=11 // pred_check_branch
          %286 = sbr.rel (%p284) target = $region40
        $region39: #{tpu_custom_call.1} parent=11 // pred_region
          _
        $region40: #{tpu_custom_call.1} parent=11 // pred_fallthru
          _
      $region12: #{tpu_custom_call.1} parent=5 // pred_fallthru
        _
      %p287 = scmp.lt.s32.totalorder %s22, 2
      // Predicated region
      $region41: #{tpu_custom_call.1} parent=5 // pred_check
        %p288 = pneg %p287
      $region42: #{tpu_custom_call.1} parent=5 // pred_check_branch
        %290 = sbr.rel (%p288) target = $region44
      $region43: #{tpu_custom_call.1} parent=5 // pred_region
        // Predicated region
        $region45: #{tpu_custom_call.1} parent=43 // pred_check
          %p291 = pneg %p42
        $region46: #{tpu_custom_call.1} parent=43 // pred_check_branch
          %293 = sbr.rel (%p291) target = $region48
        $region47: #{tpu_custom_call.1} parent=43 // pred_region
          %s294 = sand.u32 %s32, 1
          %s295 = scalar_lea.sflag [#allocation3], %s294
          %s296 = sand.u32 %s32, 1
          %s297 = smul.addr %s296, 16
          %s298 = scalar_lea.vmem [#allocation2], %s297
          %s299 = smul.u32 2, %s22
          %s301 = ssub.s32 256, 256
          %302 = vsyncadd %s295, %s301
          %s303 = smul.addr %s299, 128
          %s304 = scalar_lea.hbm %s0, %s303
          %s305 = sshll.u32 %s298, 4
          %s306 = int_to_ptr.vmem [resolvable:$true] %s305
          %311 = dma.hbm_to_vmem [thread:$0]  %s304, 256, %s306, %s295, 128, 128, 8
        $region48: #{tpu_custom_call.1} parent=43 // pred_fallthru
          _
      $region44: #{tpu_custom_call.1} parent=5 // pred_fallthru
        _
      %p312 = scmp.le.s32.totalorder 1, %s22
      %p313 = scmp.lt.s32.totalorder %s22, 3
      %p314 = pnand %p312, %p313
      %p315 = pneg %p314
      // Predicated region
      $region49: #{tpu_custom_call.1} parent=5 // pred_check
        _
      $region50: #{tpu_custom_call.1} parent=5 // pred_check_branch
        %317 = sbr.rel (%p314) target = $region52
      $region51: #{tpu_custom_call.1} parent=5 // pred_region
        %s318 = ssub.s32 %s22, 1
        %s319 = sand.u32 %s35, 1
        %s320 = scalar_lea.sflag [#allocation3], %s319
        %s321 = sand.u32 %s35, 1
        %s322 = smul.addr %s321, 16
        %s323 = scalar_lea.vmem [#allocation2], %s322
        // Predicated region
        $region53: #{tpu_custom_call.1} parent=51 // pred_check
          %p324 = pneg %p48
        $region54: #{tpu_custom_call.1} parent=51 // pred_check_branch
          %326 = sbr.rel (%p324) target = $region56
        $region55: #{tpu_custom_call.1} parent=51 // pred_region
          %327 = dma.done %s320, 256
        $region56: #{tpu_custom_call.1} parent=51 // pred_fallthru
          _
        // Predicated region
        $region57: #{tpu_custom_call.1} parent=51 // pred_check
          %p328 = pneg %p69
        $region58: #{tpu_custom_call.1} parent=51 // pred_check_branch
          %330 = sbr.rel (%p328) target = $region60
        $region59: #{tpu_custom_call.1} parent=51 // pred_region
          %331 = dma.done [#allocation6], 512
        $region60: #{tpu_custom_call.1} parent=51 // pred_fallthru
          _
        // Predicated region
        $region61: #{tpu_custom_call.1} parent=51 // pred_check
          %p332 = pneg %p90
        $region62: #{tpu_custom_call.1} parent=51 // pred_check_branch
          %334 = sbr.rel (%p332) target = $region64
        $region63: #{tpu_custom_call.1} parent=51 // pred_region
          %335 = dma.done [#allocation6], 512
        $region64: #{tpu_custom_call.1} parent=51 // pred_fallthru
          _
        // Predicated region
        $region65: #{tpu_custom_call.1} parent=51 // pred_check
          %p336 = pneg %p111
        $region66: #{tpu_custom_call.1} parent=51 // pred_check_branch
          %338 = sbr.rel (%p336) target = $region68
        $region67: #{tpu_custom_call.1} parent=51 // pred_region
          %339 = dma.done [#allocation9], 512
        $region68: #{tpu_custom_call.1} parent=51 // pred_fallthru
          _
        %s340 = sand.u32 %s35, 1
        %s341 = scalar_lea.sflag [#allocation3], %s340
        %s342 = sand.u32 %s35, 1
        %s343 = smul.addr %s342, 16
        %s344 = scalar_lea.vmem [#allocation2], %s343
        %p345 = pneg %p48
        %p346 = pneg %p45
        %p347 = pneg %p69
        %p348 = pneg %p66
        %p349 = pneg %p90
        %p350 = pneg %p87
        %p351 = pneg %p111
        %p352 = pneg %p108
        %p353 = pneg %p132
        %p354 = pneg %p129
        %p355 = pneg %p153
        %p356 = pneg %p150
        %p357 = pneg %p174
        %p358 = pneg %p171
        %p359 = pneg %p195
        %p360 = pneg %p192
        %p361 = pneg %p221
        %p362 = pneg %p218
        %s363 = sand.u32 %s208, 1
        %s364 = scalar_lea.sflag [#allocation4], %s363
        %s365 = sand.u32 %s208, 1
        %s366 = smul.addr %s365, 16
        %s367 = scalar_lea.vmem [#allocation10], %s366
        %s368 = smul.u32 2, %s27
        %s369 = smul.u32 2, %s27
        %v370 = vld [vmem:[%s323] sm:$0xff]
        %v371 = vld [vmem:[%s323 + $0x8] sm:$0xff]
        %v372 = vld [vmem:[#allocation5] sm:$0xff]
        %v373 = vld [vmem:[#allocation5 + $0x8] sm:$0xff]
        %v374 = vld [vmem:[#allocation5 + $0x10] sm:$0xff]
        %v375 = vld [vmem:[#allocation5 + $0x18] sm:$0xff]
        %vm376 = vcmask 261120
        %v378 = vsel %vm376, %v370, 0
        %v381 = vsel %vm376, %v371, 0
        %383 = vmatprep.subr.mxu0 0.0
        %384 = vmatpush1.msra.mxu0 0.0
        %385 = vmatprep.subr.mxu0 0.0
        %386 = vmatpush1.msra.mxu0 0.0
        %387 = vmatprep.subr.mxu0 0.0
        %388 = vmatpush1.msra.mxu0 0.0
        %389 = vmatprep.subr.mxu0 0.0
        %390 = vmatpush1.msra.mxu0 0.0
        %391 = vmatprep.subr.mxu0 0.0
        %392 = vmatpush1.msra.mxu0 0.0
        %393 = vmatprep.subr.mxu0 0.0
        %394 = vmatpush1.msra.mxu0 0.0
        %395 = vmatprep.subr.mxu0 0.0
        %396 = vmatpush1.msra.mxu0 0.0
        %397 = vmatprep.subr.mxu0 0.0
        %398 = vmatpush1.msra.mxu0 0.0
        %399 = vmatprep.subr.mxu0 0.0
        %400 = vmatpush1.msra.mxu0 0.0
        %401 = vmatprep.subr.mxu0 0.0
        %402 = vmatpush1.msra.mxu0 0.0
        %403 = vmatprep.subr.mxu0 0.0
        %404 = vmatpush1.msra.mxu0 0.0
        %405 = vmatprep.subr.mxu0 0.0
        %406 = vmatpush1.msra.mxu0 0.0
        %407 = vmatprep.subr.mxu0 0.0
        %408 = vmatpush1.msra.mxu0 %v375
        %409 = vmatprep.subr.mxu0 0.0
        %410 = vmatpush1.msra.mxu0 %v374
        %411 = vmatprep.subr.mxu0 0.0
        %412 = vmatpush1.msra.mxu0 %v373
        %413 = vmatprep.subr.mxu0 0.0
        %414 = vmatpush1.msra.mxu0 %v372
        %415 = vmatprep.subr.mxu0 0.0
        %416 = vmatpush2.msra.mxu0 0.0
        %417 = vmatprep.subr.mxu0 0.0
        %418 = vmatpush2.msra.mxu0 0.0
        %419 = vmatprep.subr.mxu0 0.0
        %420 = vmatpush2.msra.mxu0 0.0
        %421 = vmatprep.subr.mxu0 0.0
        %422 = vmatpush2.msra.mxu0 0.0
        %423 = vmatprep.subr.mxu0 0.0
        %424 = vmatpush2.msra.mxu0 0.0
        %425 = vmatprep.subr.mxu0 0.0
        %426 = vmatpush2.msra.mxu0 0.0
        %427 = vmatprep.subr.mxu0 0.0
        %428 = vmatpush2.msra.mxu0 0.0
        %429 = vmatprep.subr.mxu0 0.0
        %430 = vmatpush2.msra.mxu0 0.0
        %431 = vmatprep.subr.mxu0 0.0
        %432 = vmatpush2.msra.mxu0 0.0
        %433 = vmatprep.subr.mxu0 0.0
        %434 = vmatpush2.msra.mxu0 0.0
        %435 = vmatprep.subr.mxu0 0.0
        %436 = vmatpush2.msra.mxu0 0.0
        %437 = vmatprep.subr.mxu0 0.0
        %438 = vmatpush2.msra.mxu0 0.0
        %439 = vmatprep.subr.mxu0 0.0
        %440 = vmatpush2.msra.mxu0 0.0
        %441 = vmatprep.subr.mxu0 0.0
        %442 = vmatpush2.msra.mxu0 0.0
        %443 = vmatprep.subr.mxu0 0.0
        %444 = vmatpush2.msra.mxu0 0.0
        %445 = vmatprep.subr.mxu0 0.0
        %446 = vmatpush2.msra.mxu0 0.0
        %447 = vmatprep.mubr.f32.mxu0 0.0
        %448 = vmatmul.mubr.f32.gmra.mxu0 %v378
        %v449 = vpop.f32.mrf.mxu0
        %v450 = vadd.f32 0.0, %v449
        %v451 = vpop.f32.mrf.mxu0
        %452 = vmatprep.mubr.f32.mxu0 0.0
        %453 = vmatmul.mubr.f32.gmra.mxu0 %v381
        %v454 = vpop.f32.mrf.mxu0
        %v455 = vadd.f32 0.0, %v454
        %v456 = vpop.f32.mrf.mxu0
        %457 = vdwg.mxu0
        %v458 = vmul.f32 %v450, 0.25
        %v459 = vmul.f32 %v455, 0.25
        %v460 = vld [vmem:[%s4] sm:$0x3]
        %v461 = vmul.f32 %v460, 0.25
        %v462 = vld [vmem:[%s5] sm:$0x3]
        %v463 = vmul.f32 %v462, 0.25
        %v464 = vlaneseq
        %v465 = vshrl.u32 %v464, 7
        %v466 = vadd.s32 %v465, 8
        %v467 = vlaneseq
        %v468 = vand.u32 %v467, 127
        %v469 = vadd.s32 %v465, 1
        %v470 = vadd.s32 %v466, 1
        %vm471 = vcmp.eq.s32.totalorder %v469, 16
        %vm472 = vcmp.eq.s32.totalorder %v470, 16
        %v473 = vsel %vm471, 0, %v469
        %v474 = vsel %vm472, 0, %v470
        %v475 = vand.u32 %v473, 1
        %v476 = vand.u32 %v474, 1
        %vm477 = vcmp.eq.s32.totalorder %v475, 1
        %vm478 = vcmp.eq.s32.totalorder %v476, 1
        %v479 = vshra.s32 %v473, 1
        %v480 = vshra.s32 %v474, 1
        %v481 = vand.u32 %v479, 1
        %v482 = vand.u32 %v480, 1
        %vm483 = vcmp.eq.s32.totalorder %v481, 1
        %vm484 = vcmp.eq.s32.totalorder %v482, 1
        %v485 = vshra.s32 %v473, 2
        %v486 = vshra.s32 %v474, 2
        %v487 = vand.u32 %v485, 1
        %v488 = vand.u32 %v486, 1
        %vm489 = vcmp.eq.s32.totalorder %v487, 1
        %vm490 = vcmp.eq.s32.totalorder %v488, 1
        %v491 = vshra.s32 %v473, 3
        %v492 = vshra.s32 %v474, 3
        %v493 = vand.u32 %v491, 1
        %v494 = vand.u32 %v492, 1
        %vm495 = vcmp.eq.s32.totalorder %v493, 1
        %vm496 = vcmp.eq.s32.totalorder %v494, 1
        %vm497 = vcmp.le.s32.totalorder %v468, %v465
        %vm498 = vcmp.le.s32.totalorder %v468, %v466
        %v499 = vadd.s32 %v465, 2
        %v500 = vadd.s32 %v466, 2
        %vm501 = vcmp.ge.s32.totalorder %v468, %v499
        %vm502 = vcmp.ge.s32.totalorder %v468, %v500
        %v503 = vlaneseq
        %v504 = vshrl.u32 %v503, 7
        %v505 = vsub.s32 0, %v504
        %v506 = vrot.slane %v461, %v505
        %v507 = vadd.f32 %v458, %v506
        %v508 = vadd.f32 %v459, %v506
        %v509 = vld [vmem:[#allocation8] sm:$0xff]
        %v510 = vld [vmem:[#allocation8 + $0x8] sm:$0xff]
        %v511 = vlaneseq
        %v512 = vshrl.u32 %v511, 7
        %v513 = vsub.s32 0, %v512
        %v514 = vrot.slane %v463, %v513
        %vm515 = vcmask 130048
        %v517 = vsel %vm515, %v458, 0
        %v520 = vsel %vm515, %v459, 0
        %v523 = vsel %vm515, %v509, 0
        %v526 = vsel %vm515, %v510, 0
        %528 = vmatprep.subr.mxu0 0.0
        %529 = vmatpush1.xpose.msra.mxu0 0.0
        %530 = vmatprep.subr.mxu0 0.0
        %531 = vmatpush1.xpose.msra.mxu0 0.0
        %532 = vmatprep.subr.mxu0 0.0
        %533 = vmatpush1.xpose.msra.mxu0 0.0
        %534 = vmatprep.subr.mxu0 0.0
        %535 = vmatpush1.xpose.msra.mxu0 0.0
        %536 = vmatprep.subr.mxu0 0.0
        %537 = vmatpush1.xpose.msra.mxu0 0.0
        %538 = vmatprep.subr.mxu0 0.0
        %539 = vmatpush1.xpose.msra.mxu0 0.0
        %540 = vmatprep.subr.mxu0 0.0
        %541 = vmatpush1.xpose.msra.mxu0 0.0
        %542 = vmatprep.subr.mxu0 0.0
        %543 = vmatpush1.xpose.msra.mxu0 0.0
        %544 = vmatprep.subr.mxu0 0.0
        %545 = vmatpush1.xpose.msra.mxu0 0.0
        %546 = vmatprep.subr.mxu0 0.0
        %547 = vmatpush1.xpose.msra.mxu0 0.0
        %548 = vmatprep.subr.mxu0 0.0
        %549 = vmatpush1.xpose.msra.mxu0 0.0
        %550 = vmatprep.subr.mxu0 0.0
        %551 = vmatpush1.xpose.msra.mxu0 0.0
        %552 = vmatprep.subr.mxu0 0.0
        %553 = vmatpush1.xpose.msra.mxu0 0.0
        %554 = vmatprep.subr.mxu0 0.0
        %555 = vmatpush1.xpose.msra.mxu0 0.0
        %556 = vmatprep.subr.mxu0 0.0
        %557 = vmatpush1.xpose.msra.mxu0 %v526
        %558 = vmatprep.subr.mxu0 0.0
        %559 = vmatpush1.xpose.msra.mxu0 %v523
        %560 = vmatprep.subr.mxu0 0.0
        %561 = vmatpush2.xpose.msra.mxu0 0.0
        %562 = vmatprep.subr.mxu0 0.0
        %563 = vmatpush2.xpose.msra.mxu0 0.0
        %564 = vmatprep.subr.mxu0 0.0
        %565 = vmatpush2.xpose.msra.mxu0 0.0
        %566 = vmatprep.subr.mxu0 0.0
        %567 = vmatpush2.xpose.msra.mxu0 0.0
        %568 = vmatprep.subr.mxu0 0.0
        %569 = vmatpush2.xpose.msra.mxu0 0.0
        %570 = vmatprep.subr.mxu0 0.0
        %571 = vmatpush2.xpose.msra.mxu0 0.0
        %572 = vmatprep.subr.mxu0 0.0
        %573 = vmatpush2.xpose.msra.mxu0 0.0
        %574 = vmatprep.subr.mxu0 0.0
        %575 = vmatpush2.xpose.msra.mxu0 0.0
        %576 = vmatprep.subr.mxu0 0.0
        %577 = vmatpush2.xpose.msra.mxu0 0.0
        %578 = vmatprep.subr.mxu0 0.0
        %579 = vmatpush2.xpose.msra.mxu0 0.0
        %580 = vmatprep.subr.mxu0 0.0
        %581 = vmatpush2.xpose.msra.mxu0 0.0
        %582 = vmatprep.subr.mxu0 0.0
        %583 = vmatpush2.xpose.msra.mxu0 0.0
        %584 = vmatprep.subr.mxu0 0.0
        %585 = vmatpush2.xpose.msra.mxu0 0.0
        %586 = vmatprep.subr.mxu0 0.0
        %587 = vmatpush2.xpose.msra.mxu0 0.0
        %588 = vmatprep.subr.mxu0 0.0
        %589 = vmatpush2.xpose.msra.mxu0 0.0
        %590 = vmatprep.subr.mxu0 0.0
        %591 = vmatpush2.xpose.msra.mxu0 0.0
        %592 = vmatprep.mubr.f32.mxu0 0.0
        %593 = vmatmul.mubr.f32.gmra.mxu0 %v517
        %v594 = vpop.f32.mrf.mxu0
        %v595 = vadd.f32 %v514, %v594
        %v596 = vpop.f32.mrf.mxu0
        %597 = vmatprep.mubr.f32.mxu0 0.0
        %598 = vmatmul.mubr.f32.gmra.mxu0 %v520
        %v599 = vpop.f32.mrf.mxu0
        %v600 = vadd.f32 %v514, %v599
        %v601 = vpop.f32.mrf.mxu0
        %602 = vdwg.mxu0
        %605 = vrot.lane.b32.xlu0 %v595, 113
        %v606 = vpop.permute.xlu0 %605
        %607 = vrot.lane.b32.xlu0 %v600, 113
        %v608 = vpop.permute.xlu0 %607
        %611 = vrot.lane.b32.xlu0 %v595, 1
        %v612 = vpop.permute.xlu0 %611
        %613 = vrot.lane.b32.xlu0 %v600, 1
        %v614 = vpop.permute.xlu0 %613
        %vm617 = vcmask 7168
        %v618 = vsel %vm617, %v606, %v612
        %v619 = vsel %vm617, %v608, %v614
        %v620 = vsel %vm477, %v618, %v595
        %v621 = vsel %vm478, %v619, %v600
        %624 = vrot.lane.b32.xlu0 %v620, 114
        %v625 = vpop.permute.xlu0 %624
        %626 = vrot.lane.b32.xlu0 %v621, 114
        %v627 = vpop.permute.xlu0 %626
        %630 = vrot.lane.b32.xlu0 %v620, 2
        %v631 = vpop.permute.xlu0 %630
        %632 = vrot.lane.b32.xlu0 %v621, 2
        %v633 = vpop.permute.xlu0 %632
        %vm636 = vcmask 15360
        %v637 = vsel %vm636, %v625, %v631
        %v638 = vsel %vm636, %v627, %v633
        %v639 = vsel %vm483, %v637, %v620
        %v640 = vsel %vm484, %v638, %v621
        %643 = vrot.lane.b32.xlu0 %v639, 116
        %v644 = vpop.permute.xlu0 %643
        %645 = vrot.lane.b32.xlu0 %v640, 116
        %v646 = vpop.permute.xlu0 %645
        %649 = vrot.lane.b32.xlu0 %v639, 4
        %v650 = vpop.permute.xlu0 %649
        %651 = vrot.lane.b32.xlu0 %v640, 4
        %v652 = vpop.permute.xlu0 %651
        %vm655 = vcmask 31744
        %v656 = vsel %vm655, %v644, %v650
        %v657 = vsel %vm655, %v646, %v652
        %v658 = vsel %vm489, %v656, %v639
        %v659 = vsel %vm490, %v657, %v640
        %662 = vrot.lane.b32.xlu0 %v658, 120
        %v663 = vpop.permute.xlu0 %662
        %664 = vrot.lane.b32.xlu0 %v659, 120
        %v665 = vpop.permute.xlu0 %664
        %668 = vrot.lane.b32.xlu0 %v658, 8
        %v669 = vpop.permute.xlu0 %668
        %670 = vrot.lane.b32.xlu0 %v659, 8
        %v671 = vpop.permute.xlu0 %670
        %vm674 = vcmask 64512
        %v675 = vsel %vm674, %v663, %v669
        %v676 = vsel %vm674, %v665, %v671
        %v677 = vsel %vm495, %v675, %v658
        %v678 = vsel %vm496, %v676, %v659
        %vm681 = vcmask 1046528
        %v682 = vrot.slane %v677, 1
        %v683 = vrot.slane %v678, 1
        %v684 = vsel %vm681, %v682, %v683
        %v688 = vsel %vm681, %v683, %v682
        %v689 = vsel %vm497, %v677, 0.0
        %v690 = vsel %vm498, %v678, 0.0
        %v691 = vsel %vm501, %v684, 0.0
        %v692 = vsel %vm502, %v688, 0.0
        %v693 = vadd.f32 %v689, %v691
        %v694 = vadd.f32 %v690, %v692
        %697 = vrot.lane.b32.xlu0 %v450, 96
        %v698 = vpop.permute.xlu0 %697
        %699 = vrot.lane.b32.xlu0 %v455, 96
        %v700 = vpop.permute.xlu0 %699
        %v702 = vsel %vm515, %v507, 0
        %v705 = vsel %vm515, %v508, 0
        %v707 = vsel %vm515, %v698, 0
        %v709 = vsel %vm515, %v700, 0
        %711 = vmatprep.subr.mxu0 0.0
        %712 = vmatpush1.xpose.msra.mxu0 0.0
        %713 = vmatprep.subr.mxu0 0.0
        %714 = vmatpush1.xpose.msra.mxu0 0.0
        %715 = vmatprep.subr.mxu0 0.0
        %716 = vmatpush1.xpose.msra.mxu0 0.0
        %717 = vmatprep.subr.mxu0 0.0
        %718 = vmatpush1.xpose.msra.mxu0 0.0
        %719 = vmatprep.subr.mxu0 0.0
        %720 = vmatpush1.xpose.msra.mxu0 0.0
        %721 = vmatprep.subr.mxu0 0.0
        %722 = vmatpush1.xpose.msra.mxu0 0.0
        %723 = vmatprep.subr.mxu0 0.0
        %724 = vmatpush1.xpose.msra.mxu0 0.0
        %725 = vmatprep.subr.mxu0 0.0
        %726 = vmatpush1.xpose.msra.mxu0 0.0
        %727 = vmatprep.subr.mxu0 0.0
        %728 = vmatpush1.xpose.msra.mxu0 0.0
        %729 = vmatprep.subr.mxu0 0.0
        %730 = vmatpush1.xpose.msra.mxu0 0.0
        %731 = vmatprep.subr.mxu0 0.0
        %732 = vmatpush1.xpose.msra.mxu0 0.0
        %733 = vmatprep.subr.mxu0 0.0
        %734 = vmatpush1.xpose.msra.mxu0 0.0
        %735 = vmatprep.subr.mxu0 0.0
        %736 = vmatpush1.xpose.msra.mxu0 0.0
        %737 = vmatprep.subr.mxu0 0.0
        %738 = vmatpush1.xpose.msra.mxu0 0.0
        %739 = vmatprep.subr.mxu0 0.0
        %740 = vmatpush1.xpose.msra.mxu0 %v709
        %741 = vmatprep.subr.mxu0 0.0
        %742 = vmatpush1.xpose.msra.mxu0 %v707
        %743 = vmatprep.subr.mxu0 0.0
        %744 = vmatpush2.xpose.msra.mxu0 0.0
        %745 = vmatprep.subr.mxu0 0.0
        %746 = vmatpush2.xpose.msra.mxu0 0.0
        %747 = vmatprep.subr.mxu0 0.0
        %748 = vmatpush2.xpose.msra.mxu0 0.0
        %749 = vmatprep.subr.mxu0 0.0
        %750 = vmatpush2.xpose.msra.mxu0 0.0
        %751 = vmatprep.subr.mxu0 0.0
        %752 = vmatpush2.xpose.msra.mxu0 0.0
        %753 = vmatprep.subr.mxu0 0.0
        %754 = vmatpush2.xpose.msra.mxu0 0.0
        %755 = vmatprep.subr.mxu0 0.0
        %756 = vmatpush2.xpose.msra.mxu0 0.0
        %757 = vmatprep.subr.mxu0 0.0
        %758 = vmatpush2.xpose.msra.mxu0 0.0
        %759 = vmatprep.subr.mxu0 0.0
        %760 = vmatpush2.xpose.msra.mxu0 0.0
        %761 = vmatprep.subr.mxu0 0.0
        %762 = vmatpush2.xpose.msra.mxu0 0.0
        %763 = vmatprep.subr.mxu0 0.0
        %764 = vmatpush2.xpose.msra.mxu0 0.0
        %765 = vmatprep.subr.mxu0 0.0
        %766 = vmatpush2.xpose.msra.mxu0 0.0
        %767 = vmatprep.subr.mxu0 0.0
        %768 = vmatpush2.xpose.msra.mxu0 0.0
        %769 = vmatprep.subr.mxu0 0.0
        %770 = vmatpush2.xpose.msra.mxu0 0.0
        %771 = vmatprep.subr.mxu0 0.0
        %772 = vmatpush2.xpose.msra.mxu0 0.0
        %773 = vmatprep.subr.mxu0 0.0
        %774 = vmatpush2.xpose.msra.mxu0 0.0
        %775 = vmatprep.mubr.f32.mxu0 0.0
        %776 = vmatmul.mubr.f32.gmra.mxu0 %v702
        %v777 = vpop.f32.mrf.mxu0
        %v778 = vadd.f32 %v693, %v777
        %v779 = vpop.f32.mrf.mxu0
        %780 = vmatprep.mubr.f32.mxu0 0.0
        %781 = vmatmul.mubr.f32.gmra.mxu0 %v705
        %v782 = vpop.f32.mrf.mxu0
        %v783 = vadd.f32 %v694, %v782
        %v784 = vpop.f32.mrf.mxu0
        %785 = vdwg.mxu0
        %v786 = vsel %vm515, %v778, -inf
        %787 = vmax.xlane.f32.xlu0 %v786
        %v788 = vpop.xlane.xlu0 %787
        %v789 = vsel %vm515, %v783, -inf
        %790 = vmax.xlane.f32.xlu0 %v789
        %v791 = vpop.xlane.xlu0 %790
        %v792 = vsub.f32 %v778, %v788
        %v793 = vsub.f32 %v783, %v791
        %v794 = vmul.f32 %v792, 1.442695
        %v795 = vpow.pop %v794
        %v796 = vmul.f32 %v793, 1.442695
        %v797 = vpow.pop %v796
        %v798 = vsel %vm515, %v795, 0.0
        %799 = vadd.xlane.f32.xlu0 %v798
        %v800 = vpop.xlane.xlu0 %799
        %v801 = vsel %vm515, %v797, 0.0
        %802 = vadd.xlane.f32.xlu0 %v801
        %v803 = vpop.xlane.xlu0 %802
        %v804 = vrcp.pop %v800
        %v805 = vrcp.pop %v803
        %v806 = vmul.f32 %v795, %v804
        %v807 = vmul.f32 %v797, %v805
        %808 = vrot.lane.b32.xlu0 %v450, 64
        %v809 = vpop.permute.xlu0 %808
        %810 = vrot.lane.b32.xlu0 %v455, 64
        %v811 = vpop.permute.xlu0 %810
        %v815 = vsel %vm515, %v806, 0
        %v818 = vsel %vm515, %v807, 0
        %820 = vmatprep.subr.mxu0 0.0
        %821 = vmatpush1.msra.mxu0 0.0
        %822 = vmatprep.subr.mxu0 0.0
        %823 = vmatpush1.msra.mxu0 0.0
        %824 = vmatprep.subr.mxu0 0.0
        %825 = vmatpush1.msra.mxu0 0.0
        %826 = vmatprep.subr.mxu0 0.0
        %827 = vmatpush1.msra.mxu0 0.0
        %828 = vmatprep.subr.mxu0 0.0
        %829 = vmatpush1.msra.mxu0 0.0
        %830 = vmatprep.subr.mxu0 0.0
        %831 = vmatpush1.msra.mxu0 0.0
        %832 = vmatprep.subr.mxu0 0.0
        %833 = vmatpush1.msra.mxu0 0.0
        %834 = vmatprep.subr.mxu0 0.0
        %835 = vmatpush1.msra.mxu0 0.0
        %836 = vmatprep.subr.mxu0 0.0
        %837 = vmatpush1.msra.mxu0 0.0
        %838 = vmatprep.subr.mxu0 0.0
        %839 = vmatpush1.msra.mxu0 0.0
        %840 = vmatprep.subr.mxu0 0.0
        %841 = vmatpush1.msra.mxu0 0.0
        %842 = vmatprep.subr.mxu0 0.0
        %843 = vmatpush1.msra.mxu0 0.0
        %844 = vmatprep.subr.mxu0 0.0
        %845 = vmatpush1.msra.mxu0 0.0
        %846 = vmatprep.subr.mxu0 0.0
        %847 = vmatpush1.msra.mxu0 0.0
        %848 = vmatprep.subr.mxu0 0.0
        %849 = vmatpush1.msra.mxu0 %v811
        %850 = vmatprep.subr.mxu0 0.0
        %851 = vmatpush1.msra.mxu0 %v809
        %852 = vmatprep.subr.mxu0 0.0
        %853 = vmatpush2.msra.mxu0 0.0
        %854 = vmatprep.subr.mxu0 0.0
        %855 = vmatpush2.msra.mxu0 0.0
        %856 = vmatprep.subr.mxu0 0.0
        %857 = vmatpush2.msra.mxu0 0.0
        %858 = vmatprep.subr.mxu0 0.0
        %859 = vmatpush2.msra.mxu0 0.0
        %860 = vmatprep.subr.mxu0 0.0
        %861 = vmatpush2.msra.mxu0 0.0
        %862 = vmatprep.subr.mxu0 0.0
        %863 = vmatpush2.msra.mxu0 0.0
        %864 = vmatprep.subr.mxu0 0.0
        %865 = vmatpush2.msra.mxu0 0.0
        %866 = vmatprep.subr.mxu0 0.0
        %867 = vmatpush2.msra.mxu0 0.0
        %868 = vmatprep.subr.mxu0 0.0
        %869 = vmatpush2.msra.mxu0 0.0
        %870 = vmatprep.subr.mxu0 0.0
        %871 = vmatpush2.msra.mxu0 0.0
        %872 = vmatprep.subr.mxu0 0.0
        %873 = vmatpush2.msra.mxu0 0.0
        %874 = vmatprep.subr.mxu0 0.0
        %875 = vmatpush2.msra.mxu0 0.0
        %876 = vmatprep.subr.mxu0 0.0
        %877 = vmatpush2.msra.mxu0 0.0
        %878 = vmatprep.subr.mxu0 0.0
        %879 = vmatpush2.msra.mxu0 0.0
        %880 = vmatprep.subr.mxu0 0.0
        %881 = vmatpush2.msra.mxu0 0.0
        %882 = vmatprep.subr.mxu0 0.0
        %883 = vmatpush2.msra.mxu0 0.0
        %884 = vmatprep.mubr.f32.mxu0 0.0
        %885 = vmatmul.mubr.f32.gmra.mxu0 %v815
        %v886 = vpop.f32.mrf.mxu0
        %v887 = vadd.f32 0.0, %v886
        %v888 = vpop.f32.mrf.mxu0
        %889 = vmatprep.mubr.f32.mxu0 0.0
        %890 = vmatmul.mubr.f32.gmra.mxu0 %v818
        %v891 = vpop.f32.mrf.mxu0
        %v892 = vadd.f32 0.0, %v891
        %v893 = vpop.f32.mrf.mxu0
        %894 = vdwg.mxu0
        %v895 = vld [vmem:[#allocation7] sm:$0xff]
        %v896 = vld [vmem:[#allocation7 + $0x8] sm:$0xff]
        %v897 = vlaneseq
        %v898 = vshrl.u32 %v897, 7
        %v899 = vsub.s32 1, %v898
        %v900 = vrot.slane %v461, %v899
        %902 = vrot.lane.b32.xlu0 %v900, 16
        %v903 = vpop.permute.xlu0 %902
        %v905 = vadd.f32 %v458, %v903
        %v906 = vadd.f32 %v459, %v903
        %s907 = scalar_lea.vmem [#allocation8], 16
        %v908 = vld [vmem:[%s907] sm:$0xff]
        %v909 = vld [vmem:[%s907 + $0x8] sm:$0xff]
        %v910 = vlaneseq
        %v911 = vshrl.u32 %v910, 7
        %v912 = vsub.s32 1, %v911
        %v913 = vrot.slane %v463, %v912
        %914 = vrot.lane.b32.xlu0 %v458, 112
        %v915 = vpop.permute.xlu0 %914
        %916 = vrot.lane.b32.xlu0 %v459, 112
        %v917 = vpop.permute.xlu0 %916
        %v918 = vsel %vm515, %v915, 0
        %v920 = vsel %vm515, %v917, 0
        %v923 = vsel %vm515, %v908, 0
        %v926 = vsel %vm515, %v909, 0
        %928 = vmatprep.subr.mxu0 0.0
        %929 = vmatpush1.xpose.msra.mxu0 0.0
        %930 = vmatprep.subr.mxu0 0.0
        %931 = vmatpush1.xpose.msra.mxu0 0.0
        %932 = vmatprep.subr.mxu0 0.0
        %933 = vmatpush1.xpose.msra.mxu0 0.0
        %934 = vmatprep.subr.mxu0 0.0
        %935 = vmatpush1.xpose.msra.mxu0 0.0
        %936 = vmatprep.subr.mxu0 0.0
        %937 = vmatpush1.xpose.msra.mxu0 0.0
        %938 = vmatprep.subr.mxu0 0.0
        %939 = vmatpush1.xpose.msra.mxu0 0.0
        %940 = vmatprep.subr.mxu0 0.0
        %941 = vmatpush1.xpose.msra.mxu0 0.0
        %942 = vmatprep.subr.mxu0 0.0
        %943 = vmatpush1.xpose.msra.mxu0 0.0
        %944 = vmatprep.subr.mxu0 0.0
        %945 = vmatpush1.xpose.msra.mxu0 0.0
        %946 = vmatprep.subr.mxu0 0.0
        %947 = vmatpush1.xpose.msra.mxu0 0.0
        %948 = vmatprep.subr.mxu0 0.0
        %949 = vmatpush1.xpose.msra.mxu0 0.0
        %950 = vmatprep.subr.mxu0 0.0
        %951 = vmatpush1.xpose.msra.mxu0 0.0
        %952 = vmatprep.subr.mxu0 0.0
        %953 = vmatpush1.xpose.msra.mxu0 0.0
        %954 = vmatprep.subr.mxu0 0.0
        %955 = vmatpush1.xpose.msra.mxu0 0.0
        %956 = vmatprep.subr.mxu0 0.0
        %957 = vmatpush1.xpose.msra.mxu0 %v926
        %958 = vmatprep.subr.mxu0 0.0
        %959 = vmatpush1.xpose.msra.mxu0 %v923
        %960 = vmatprep.subr.mxu0 0.0
        %961 = vmatpush2.xpose.msra.mxu0 0.0
        %962 = vmatprep.subr.mxu0 0.0
        %963 = vmatpush2.xpose.msra.mxu0 0.0
        %964 = vmatprep.subr.mxu0 0.0
        %965 = vmatpush2.xpose.msra.mxu0 0.0
        %966 = vmatprep.subr.mxu0 0.0
        %967 = vmatpush2.xpose.msra.mxu0 0.0
        %968 = vmatprep.subr.mxu0 0.0
        %969 = vmatpush2.xpose.msra.mxu0 0.0
        %970 = vmatprep.subr.mxu0 0.0
        %971 = vmatpush2.xpose.msra.mxu0 0.0
        %972 = vmatprep.subr.mxu0 0.0
        %973 = vmatpush2.xpose.msra.mxu0 0.0
        %974 = vmatprep.subr.mxu0 0.0
        %975 = vmatpush2.xpose.msra.mxu0 0.0
        %976 = vmatprep.subr.mxu0 0.0
        %977 = vmatpush2.xpose.msra.mxu0 0.0
        %978 = vmatprep.subr.mxu0 0.0
        %979 = vmatpush2.xpose.msra.mxu0 0.0
        %980 = vmatprep.subr.mxu0 0.0
        %981 = vmatpush2.xpose.msra.mxu0 0.0
        %982 = vmatprep.subr.mxu0 0.0
        %983 = vmatpush2.xpose.msra.mxu0 0.0
        %984 = vmatprep.subr.mxu0 0.0
        %985 = vmatpush2.xpose.msra.mxu0 0.0
        %986 = vmatprep.subr.mxu0 0.0
        %987 = vmatpush2.xpose.msra.mxu0 0.0
        %988 = vmatprep.subr.mxu0 0.0
        %989 = vmatpush2.xpose.msra.mxu0 0.0
        %990 = vmatprep.subr.mxu0 0.0
        %991 = vmatpush2.xpose.msra.mxu0 0.0
        %992 = vmatprep.mubr.f32.mxu0 0.0
        %993 = vmatmul.mubr.f32.gmra.mxu0 %v918
        %v994 = vpop.f32.mrf.mxu0
        %v995 = vadd.f32 %v913, %v994
        %v996 = vpop.f32.mrf.mxu0
        %997 = vmatprep.mubr.f32.mxu0 0.0
        %998 = vmatmul.mubr.f32.gmra.mxu0 %v920
        %v999 = vpop.f32.mrf.mxu0
        %v1000 = vadd.f32 %v913, %v999
        %v1001 = vpop.f32.mrf.mxu0
        %1002 = vdwg.mxu0
        %1005 = vrot.lane.b32.xlu0 %v995, 113
        %v1006 = vpop.permute.xlu0 %1005
        %1007 = vrot.lane.b32.xlu0 %v1000, 113
        %v1008 = vpop.permute.xlu0 %1007
        %1011 = vrot.lane.b32.xlu0 %v995, 1
        %v1012 = vpop.permute.xlu0 %1011
        %1013 = vrot.lane.b32.xlu0 %v1000, 1
        %v1014 = vpop.permute.xlu0 %1013
        %v1017 = vsel %vm617, %v1006, %v1012
        %v1018 = vsel %vm617, %v1008, %v1014
        %v1019 = vsel %vm477, %v1017, %v995
        %v1020 = vsel %vm478, %v1018, %v1000
        %1023 = vrot.lane.b32.xlu0 %v1019, 114
        %v1024 = vpop.permute.xlu0 %1023
        %1025 = vrot.lane.b32.xlu0 %v1020, 114
        %v1026 = vpop.permute.xlu0 %1025
        %1029 = vrot.lane.b32.xlu0 %v1019, 2
        %v1030 = vpop.permute.xlu0 %1029
        %1031 = vrot.lane.b32.xlu0 %v1020, 2
        %v1032 = vpop.permute.xlu0 %1031
        %v1035 = vsel %vm636, %v1024, %v1030
        %v1036 = vsel %vm636, %v1026, %v1032
        %v1037 = vsel %vm483, %v1035, %v1019
        %v1038 = vsel %vm484, %v1036, %v1020
        %1041 = vrot.lane.b32.xlu0 %v1037, 116
        %v1042 = vpop.permute.xlu0 %1041
        %1043 = vrot.lane.b32.xlu0 %v1038, 116
        %v1044 = vpop.permute.xlu0 %1043
        %1047 = vrot.lane.b32.xlu0 %v1037, 4
        %v1048 = vpop.permute.xlu0 %1047
        %1049 = vrot.lane.b32.xlu0 %v1038, 4
        %v1050 = vpop.permute.xlu0 %1049
        %v1053 = vsel %vm655, %v1042, %v1048
        %v1054 = vsel %vm655, %v1044, %v1050
        %v1055 = vsel %vm489, %v1053, %v1037
        %v1056 = vsel %vm490, %v1054, %v1038
        %1059 = vrot.lane.b32.xlu0 %v1055, 120
        %v1060 = vpop.permute.xlu0 %1059
        %1061 = vrot.lane.b32.xlu0 %v1056, 120
        %v1062 = vpop.permute.xlu0 %1061
        %1065 = vrot.lane.b32.xlu0 %v1055, 8
        %v1066 = vpop.permute.xlu0 %1065
        %1067 = vrot.lane.b32.xlu0 %v1056, 8
        %v1068 = vpop.permute.xlu0 %1067
        %v1071 = vsel %vm674, %v1060, %v1066
        %v1072 = vsel %vm674, %v1062, %v1068
        %v1073 = vsel %vm495, %v1071, %v1055
        %v1074 = vsel %vm496, %v1072, %v1056
        %v1077 = vrot.slane %v1073, 1
        %v1078 = vrot.slane %v1074, 1
        %v1079 = vsel %vm681, %v1077, %v1078
        %v1083 = vsel %vm681, %v1078, %v1077
        %v1084 = vsel %vm497, %v1073, 0.0
        %v1085 = vsel %vm498, %v1074, 0.0
        %v1086 = vsel %vm501, %v1079, 0.0
        %v1087 = vsel %vm502, %v1083, 0.0
        %v1088 = vadd.f32 %v1084, %v1086
        %v1089 = vadd.f32 %v1085, %v1087
        %1092 = vrot.lane.b32.xlu0 %v905, 112
        %v1093 = vpop.permute.xlu0 %1092
        %1094 = vrot.lane.b32.xlu0 %v906, 112
        %v1095 = vpop.permute.xlu0 %1094
        %1096 = vrot.lane.b32.xlu0 %v450, 80
        %v1097 = vpop.permute.xlu0 %1096
        %1098 = vrot.lane.b32.xlu0 %v455, 80
        %v1099 = vpop.permute.xlu0 %1098
        %v1100 = vsel %vm515, %v1093, 0
        %v1102 = vsel %vm515, %v1095, 0
        %v1104 = vsel %vm515, %v1097, 0
        %v1106 = vsel %vm515, %v1099, 0
        %1108 = vmatprep.subr.mxu0 0.0
        %1109 = vmatpush1.xpose.msra.mxu0 0.0
        %1110 = vmatprep.subr.mxu0 0.0
        %1111 = vmatpush1.xpose.msra.mxu0 0.0
        %1112 = vmatprep.subr.mxu0 0.0
        %1113 = vmatpush1.xpose.msra.mxu0 0.0
        %1114 = vmatprep.subr.mxu0 0.0
        %1115 = vmatpush1.xpose.msra.mxu0 0.0
        %1116 = vmatprep.subr.mxu0 0.0
        %1117 = vmatpush1.xpose.msra.mxu0 0.0
        %1118 = vmatprep.subr.mxu0 0.0
        %1119 = vmatpush1.xpose.msra.mxu0 0.0
        %1120 = vmatprep.subr.mxu0 0.0
        %1121 = vmatpush1.xpose.msra.mxu0 0.0
        %1122 = vmatprep.subr.mxu0 0.0
        %1123 = vmatpush1.xpose.msra.mxu0 0.0
        %1124 = vmatprep.subr.mxu0 0.0
        %1125 = vmatpush1.xpose.msra.mxu0 0.0
        %1126 = vmatprep.subr.mxu0 0.0
        %1127 = vmatpush1.xpose.msra.mxu0 0.0
        %1128 = vmatprep.subr.mxu0 0.0
        %1129 = vmatpush1.xpose.msra.mxu0 0.0
        %1130 = vmatprep.subr.mxu0 0.0
        %1131 = vmatpush1.xpose.msra.mxu0 0.0
        %1132 = vmatprep.subr.mxu0 0.0
        %1133 = vmatpush1.xpose.msra.mxu0 0.0
        %1134 = vmatprep.subr.mxu0 0.0
        %1135 = vmatpush1.xpose.msra.mxu0 0.0
        %1136 = vmatprep.subr.mxu0 0.0
        %1137 = vmatpush1.xpose.msra.mxu0 %v1106
        %1138 = vmatprep.subr.mxu0 0.0
        %1139 = vmatpush1.xpose.msra.mxu0 %v1104
        %1140 = vmatprep.subr.mxu0 0.0
        %1141 = vmatpush2.xpose.msra.mxu0 0.0
        %1142 = vmatprep.subr.mxu0 0.0
        %1143 = vmatpush2.xpose.msra.mxu0 0.0
        %1144 = vmatprep.subr.mxu0 0.0
        %1145 = vmatpush2.xpose.msra.mxu0 0.0
        %1146 = vmatprep.subr.mxu0 0.0
        %1147 = vmatpush2.xpose.msra.mxu0 0.0
        %1148 = vmatprep.subr.mxu0 0.0
        %1149 = vmatpush2.xpose.msra.mxu0 0.0
        %1150 = vmatprep.subr.mxu0 0.0
        %1151 = vmatpush2.xpose.msra.mxu0 0.0
        %1152 = vmatprep.subr.mxu0 0.0
        %1153 = vmatpush2.xpose.msra.mxu0 0.0
        %1154 = vmatprep.subr.mxu0 0.0
        %1155 = vmatpush2.xpose.msra.mxu0 0.0
        %1156 = vmatprep.subr.mxu0 0.0
        %1157 = vmatpush2.xpose.msra.mxu0 0.0
        %1158 = vmatprep.subr.mxu0 0.0
        %1159 = vmatpush2.xpose.msra.mxu0 0.0
        %1160 = vmatprep.subr.mxu0 0.0
        %1161 = vmatpush2.xpose.msra.mxu0 0.0
        %1162 = vmatprep.subr.mxu0 0.0
        %1163 = vmatpush2.xpose.msra.mxu0 0.0
        %1164 = vmatprep.subr.mxu0 0.0
        %1165 = vmatpush2.xpose.msra.mxu0 0.0
        %1166 = vmatprep.subr.mxu0 0.0
        %1167 = vmatpush2.xpose.msra.mxu0 0.0
        %1168 = vmatprep.subr.mxu0 0.0
        %1169 = vmatpush2.xpose.msra.mxu0 0.0
        %1170 = vmatprep.subr.mxu0 0.0
        %1171 = vmatpush2.xpose.msra.mxu0 0.0
        %1172 = vmatprep.mubr.f32.mxu0 0.0
        %1173 = vmatmul.mubr.f32.gmra.mxu0 %v1100
        %v1174 = vpop.f32.mrf.mxu0
        %v1175 = vadd.f32 %v1088, %v1174
        %v1176 = vpop.f32.mrf.mxu0
        %1177 = vmatprep.mubr.f32.mxu0 0.0
        %1178 = vmatmul.mubr.f32.gmra.mxu0 %v1102
        %v1179 = vpop.f32.mrf.mxu0
        %v1180 = vadd.f32 %v1089, %v1179
        %v1181 = vpop.f32.mrf.mxu0
        %1182 = vdwg.mxu0
        %v1183 = vsel %vm515, %v1175, -inf
        %1184 = vmax.xlane.f32.xlu0 %v1183
        %v1185 = vpop.xlane.xlu0 %1184
        %v1186 = vsel %vm515, %v1180, -inf
        %1187 = vmax.xlane.f32.xlu0 %v1186
        %v1188 = vpop.xlane.xlu0 %1187
        %v1189 = vsub.f32 %v1175, %v1185
        %v1190 = vsub.f32 %v1180, %v1188
        %v1191 = vmul.f32 %v1189, 1.442695
        %v1192 = vpow.pop %v1191
        %v1193 = vmul.f32 %v1190, 1.442695
        %v1194 = vpow.pop %v1193
        %v1195 = vsel %vm515, %v1192, 0.0
        %1196 = vadd.xlane.f32.xlu0 %v1195
        %v1197 = vpop.xlane.xlu0 %1196
        %v1198 = vsel %vm515, %v1194, 0.0
        %1199 = vadd.xlane.f32.xlu0 %v1198
        %v1200 = vpop.xlane.xlu0 %1199
        %v1201 = vrcp.pop %v1197
        %v1202 = vrcp.pop %v1200
        %v1203 = vmul.f32 %v1192, %v1201
        %v1204 = vmul.f32 %v1194, %v1202
        %1205 = vrot.lane.b32.xlu0 %v450, 48
        %v1206 = vpop.permute.xlu0 %1205
        %1207 = vrot.lane.b32.xlu0 %v455, 48
        %v1208 = vpop.permute.xlu0 %1207
        %v1212 = vsel %vm515, %v1203, 0
        %v1215 = vsel %vm515, %v1204, 0
        %1217 = vmatprep.subr.mxu0 0.0
        %1218 = vmatpush1.msra.mxu0 0.0
        %1219 = vmatprep.subr.mxu0 0.0
        %1220 = vmatpush1.msra.mxu0 0.0
        %1221 = vmatprep.subr.mxu0 0.0
        %1222 = vmatpush1.msra.mxu0 0.0
        %1223 = vmatprep.subr.mxu0 0.0
        %1224 = vmatpush1.msra.mxu0 0.0
        %1225 = vmatprep.subr.mxu0 0.0
        %1226 = vmatpush1.msra.mxu0 0.0
        %1227 = vmatprep.subr.mxu0 0.0
        %1228 = vmatpush1.msra.mxu0 0.0
        %1229 = vmatprep.subr.mxu0 0.0
        %1230 = vmatpush1.msra.mxu0 0.0
        %1231 = vmatprep.subr.mxu0 0.0
        %1232 = vmatpush1.msra.mxu0 0.0
        %1233 = vmatprep.subr.mxu0 0.0
        %1234 = vmatpush1.msra.mxu0 0.0
        %1235 = vmatprep.subr.mxu0 0.0
        %1236 = vmatpush1.msra.mxu0 0.0
        %1237 = vmatprep.subr.mxu0 0.0
        %1238 = vmatpush1.msra.mxu0 0.0
        %1239 = vmatprep.subr.mxu0 0.0
        %1240 = vmatpush1.msra.mxu0 0.0
        %1241 = vmatprep.subr.mxu0 0.0
        %1242 = vmatpush1.msra.mxu0 0.0
        %1243 = vmatprep.subr.mxu0 0.0
        %1244 = vmatpush1.msra.mxu0 0.0
        %1245 = vmatprep.subr.mxu0 0.0
        %1246 = vmatpush1.msra.mxu0 %v1208
        %1247 = vmatprep.subr.mxu0 0.0
        %1248 = vmatpush1.msra.mxu0 %v1206
        %1249 = vmatprep.subr.mxu0 0.0
        %1250 = vmatpush2.msra.mxu0 0.0
        %1251 = vmatprep.subr.mxu0 0.0
        %1252 = vmatpush2.msra.mxu0 0.0
        %1253 = vmatprep.subr.mxu0 0.0
        %1254 = vmatpush2.msra.mxu0 0.0
        %1255 = vmatprep.subr.mxu0 0.0
        %1256 = vmatpush2.msra.mxu0 0.0
        %1257 = vmatprep.subr.mxu0 0.0
        %1258 = vmatpush2.msra.mxu0 0.0
        %1259 = vmatprep.subr.mxu0 0.0
        %1260 = vmatpush2.msra.mxu0 0.0
        %1261 = vmatprep.subr.mxu0 0.0
        %1262 = vmatpush2.msra.mxu0 0.0
        %1263 = vmatprep.subr.mxu0 0.0
        %1264 = vmatpush2.msra.mxu0 0.0
        %1265 = vmatprep.subr.mxu0 0.0
        %1266 = vmatpush2.msra.mxu0 0.0
        %1267 = vmatprep.subr.mxu0 0.0
        %1268 = vmatpush2.msra.mxu0 0.0
        %1269 = vmatprep.subr.mxu0 0.0
        %1270 = vmatpush2.msra.mxu0 0.0
        %1271 = vmatprep.subr.mxu0 0.0
        %1272 = vmatpush2.msra.mxu0 0.0
        %1273 = vmatprep.subr.mxu0 0.0
        %1274 = vmatpush2.msra.mxu0 0.0
        %1275 = vmatprep.subr.mxu0 0.0
        %1276 = vmatpush2.msra.mxu0 0.0
        %1277 = vmatprep.subr.mxu0 0.0
        %1278 = vmatpush2.msra.mxu0 0.0
        %1279 = vmatprep.subr.mxu0 0.0
        %1280 = vmatpush2.msra.mxu0 0.0
        %1281 = vmatprep.mubr.f32.mxu0 0.0
        %1282 = vmatmul.mubr.f32.gmra.mxu0 %v1212
        %v1283 = vpop.f32.mrf.mxu0
        %v1284 = vadd.f32 0.0, %v1283
        %v1285 = vpop.f32.mrf.mxu0
        %1286 = vmatprep.mubr.f32.mxu0 0.0
        %1287 = vmatmul.mubr.f32.gmra.mxu0 %v1215
        %v1288 = vpop.f32.mrf.mxu0
        %v1289 = vadd.f32 0.0, %v1288
        %v1290 = vpop.f32.mrf.mxu0
        %1291 = vdwg.mxu0
        %v1292 = vld [vmem:[#allocation7 + $0x10] sm:$0xff]
        %v1293 = vld [vmem:[#allocation7 + $0x18] sm:$0xff]
        %v1295 = vsel %vm515, %v1284, 0
        %v1298 = vsel %vm515, %v1289, 0
        %1300 = vmatprep.subr.mxu0 0.0
        %1301 = vmatpush1.msra.mxu0 0.0
        %1302 = vmatprep.subr.mxu0 0.0
        %1303 = vmatpush1.msra.mxu0 0.0
        %1304 = vmatprep.subr.mxu0 0.0
        %1305 = vmatpush1.msra.mxu0 0.0
        %1306 = vmatprep.subr.mxu0 0.0
        %1307 = vmatpush1.msra.mxu0 0.0
        %1308 = vmatprep.subr.mxu0 0.0
        %1309 = vmatpush1.msra.mxu0 0.0
        %1310 = vmatprep.subr.mxu0 0.0
        %1311 = vmatpush1.msra.mxu0 0.0
        %1312 = vmatprep.subr.mxu0 0.0
        %1313 = vmatpush1.msra.mxu0 0.0
        %1314 = vmatprep.subr.mxu0 0.0
        %1315 = vmatpush1.msra.mxu0 0.0
        %1316 = vmatprep.subr.mxu0 0.0
        %1317 = vmatpush1.msra.mxu0 0.0
        %1318 = vmatprep.subr.mxu0 0.0
        %1319 = vmatpush1.msra.mxu0 0.0
        %1320 = vmatprep.subr.mxu0 0.0
        %1321 = vmatpush1.msra.mxu0 0.0
        %1322 = vmatprep.subr.mxu0 0.0
        %1323 = vmatpush1.msra.mxu0 0.0
        %1324 = vmatprep.subr.mxu0 0.0
        %1325 = vmatpush1.msra.mxu0 0.0
        %1326 = vmatprep.subr.mxu0 0.0
        %1327 = vmatpush1.msra.mxu0 0.0
        %1328 = vmatprep.subr.mxu0 0.0
        %1329 = vmatpush1.msra.mxu0 %v1293
        %1330 = vmatprep.subr.mxu0 0.0
        %1331 = vmatpush1.msra.mxu0 %v1292
        %1332 = vmatprep.subr.mxu0 0.0
        %1333 = vmatpush2.msra.mxu0 0.0
        %1334 = vmatprep.subr.mxu0 0.0
        %1335 = vmatpush2.msra.mxu0 0.0
        %1336 = vmatprep.subr.mxu0 0.0
        %1337 = vmatpush2.msra.mxu0 0.0
        %1338 = vmatprep.subr.mxu0 0.0
        %1339 = vmatpush2.msra.mxu0 0.0
        %1340 = vmatprep.subr.mxu0 0.0
        %1341 = vmatpush2.msra.mxu0 0.0
        %1342 = vmatprep.subr.mxu0 0.0
        %1343 = vmatpush2.msra.mxu0 0.0
        %1344 = vmatprep.subr.mxu0 0.0
        %1345 = vmatpush2.msra.mxu0 0.0
        %1346 = vmatprep.subr.mxu0 0.0
        %1347 = vmatpush2.msra.mxu0 0.0
        %1348 = vmatprep.subr.mxu0 0.0
        %1349 = vmatpush2.msra.mxu0 0.0
        %1350 = vmatprep.subr.mxu0 0.0
        %1351 = vmatpush2.msra.mxu0 0.0
        %1352 = vmatprep.subr.mxu0 0.0
        %1353 = vmatpush2.msra.mxu0 0.0
        %1354 = vmatprep.subr.mxu0 0.0
        %1355 = vmatpush2.msra.mxu0 0.0
        %1356 = vmatprep.subr.mxu0 0.0
        %1357 = vmatpush2.msra.mxu0 0.0
        %1358 = vmatprep.subr.mxu0 0.0
        %1359 = vmatpush2.msra.mxu0 0.0
        %1360 = vmatprep.subr.mxu0 0.0
        %1361 = vmatpush2.msra.mxu0 0.0
        %1362 = vmatprep.subr.mxu0 0.0
        %1363 = vmatpush2.msra.mxu0 0.0
        %1364 = vmatprep.mubr.f32.mxu0 0.0
        %1365 = vmatmul.mubr.f32.gmra.mxu0 %v1295
        %v1366 = vpop.f32.mrf.mxu0
        %v1367 = vadd.f32 0.0, %v1366
        %v1368 = vpop.f32.mrf.mxu0
        %1369 = vmatprep.mubr.f32.mxu0 0.0
        %1370 = vmatmul.mubr.f32.gmra.mxu0 %v1298
        %v1371 = vpop.f32.mrf.mxu0
        %v1372 = vadd.f32 0.0, %v1371
        %v1373 = vpop.f32.mrf.mxu0
        %1374 = vdwg.mxu0
        %v1376 = vsel %vm515, %v887, 0
        %v1379 = vsel %vm515, %v892, 0
        %1381 = vmatprep.subr.mxu0 0.0
        %1382 = vmatpush1.msra.mxu0 0.0
        %1383 = vmatprep.subr.mxu0 0.0
        %1384 = vmatpush1.msra.mxu0 0.0
        %1385 = vmatprep.subr.mxu0 0.0
        %1386 = vmatpush1.msra.mxu0 0.0
        %1387 = vmatprep.subr.mxu0 0.0
        %1388 = vmatpush1.msra.mxu0 0.0
        %1389 = vmatprep.subr.mxu0 0.0
        %1390 = vmatpush1.msra.mxu0 0.0
        %1391 = vmatprep.subr.mxu0 0.0
        %1392 = vmatpush1.msra.mxu0 0.0
        %1393 = vmatprep.subr.mxu0 0.0
        %1394 = vmatpush1.msra.mxu0 0.0
        %1395 = vmatprep.subr.mxu0 0.0
        %1396 = vmatpush1.msra.mxu0 0.0
        %1397 = vmatprep.subr.mxu0 0.0
        %1398 = vmatpush1.msra.mxu0 0.0
        %1399 = vmatprep.subr.mxu0 0.0
        %1400 = vmatpush1.msra.mxu0 0.0
        %1401 = vmatprep.subr.mxu0 0.0
        %1402 = vmatpush1.msra.mxu0 0.0
        %1403 = vmatprep.subr.mxu0 0.0
        %1404 = vmatpush1.msra.mxu0 0.0
        %1405 = vmatprep.subr.mxu0 0.0
        %1406 = vmatpush1.msra.mxu0 0.0
        %1407 = vmatprep.subr.mxu0 0.0
        %1408 = vmatpush1.msra.mxu0 0.0
        %1409 = vmatprep.subr.mxu0 0.0
        %1410 = vmatpush1.msra.mxu0 %v896
        %1411 = vmatprep.subr.mxu0 0.0
        %1412 = vmatpush1.msra.mxu0 %v895
        %1413 = vmatprep.subr.mxu0 0.0
        %1414 = vmatpush2.msra.mxu0 0.0
        %1415 = vmatprep.subr.mxu0 0.0
        %1416 = vmatpush2.msra.mxu0 0.0
        %1417 = vmatprep.subr.mxu0 0.0
        %1418 = vmatpush2.msra.mxu0 0.0
        %1419 = vmatprep.subr.mxu0 0.0
        %1420 = vmatpush2.msra.mxu0 0.0
        %1421 = vmatprep.subr.mxu0 0.0
        %1422 = vmatpush2.msra.mxu0 0.0
        %1423 = vmatprep.subr.mxu0 0.0
        %1424 = vmatpush2.msra.mxu0 0.0
        %1425 = vmatprep.subr.mxu0 0.0
        %1426 = vmatpush2.msra.mxu0 0.0
        %1427 = vmatprep.subr.mxu0 0.0
        %1428 = vmatpush2.msra.mxu0 0.0
        %1429 = vmatprep.subr.mxu0 0.0
        %1430 = vmatpush2.msra.mxu0 0.0
        %1431 = vmatprep.subr.mxu0 0.0
        %1432 = vmatpush2.msra.mxu0 0.0
        %1433 = vmatprep.subr.mxu0 0.0
        %1434 = vmatpush2.msra.mxu0 0.0
        %1435 = vmatprep.subr.mxu0 0.0
        %1436 = vmatpush2.msra.mxu0 0.0
        %1437 = vmatprep.subr.mxu0 0.0
        %1438 = vmatpush2.msra.mxu0 0.0
        %1439 = vmatprep.subr.mxu0 0.0
        %1440 = vmatpush2.msra.mxu0 0.0
        %1441 = vmatprep.subr.mxu0 0.0
        %1442 = vmatpush2.msra.mxu0 0.0
        %1443 = vmatprep.subr.mxu0 0.0
        %1444 = vmatpush2.msra.mxu0 0.0
        %1445 = vmatprep.mubr.f32.mxu0 0.0
        %1446 = vmatmul.mubr.f32.gmra.mxu0 %v1376
        %v1447 = vpop.f32.mrf.mxu0
        %v1448 = vadd.f32 %v1367, %v1447
        %v1449 = vpop.f32.mrf.mxu0
        %1450 = vmatprep.mubr.f32.mxu0 0.0
        %1451 = vmatmul.mubr.f32.gmra.mxu0 %v1379
        %v1452 = vpop.f32.mrf.mxu0
        %v1453 = vadd.f32 %v1372, %v1452
        %v1454 = vpop.f32.mrf.mxu0
        %1455 = vdwg.mxu0
        %v1456 = vadd.f32 %v370, %v1448
        %v1457 = vadd.f32 %v371, %v1453
        %v1458 = vsel %vm376, %v1456, 0.0
        %1459 = vadd.xlane.f32.xlu0 %v1458
        %v1460 = vpop.xlane.xlu0 %1459
        %v1461 = vsel %vm376, %v1457, 0.0
        %1462 = vadd.xlane.f32.xlu0 %v1461
        %v1463 = vpop.xlane.xlu0 %1462
        %v1464 = vrcp.pop 32.0
        %v1465 = vmul.f32 %v1460, %v1464
        %v1466 = vmul.f32 %v1463, %v1464
        %v1467 = vsub.f32 %v1456, %v1465
        %v1468 = vsub.f32 %v1457, %v1466
        %v1469 = vmul.f32 %v1467, %v1467
        %v1470 = vmul.f32 %v1468, %v1468
        %v1471 = vsel %vm376, %v1469, 0.0
        %1472 = vadd.xlane.f32.xlu0 %v1471
        %v1473 = vpop.xlane.xlu0 %1472
        %v1474 = vsel %vm376, %v1470, 0.0
        %1475 = vadd.xlane.f32.xlu0 %v1474
        %v1476 = vpop.xlane.xlu0 %1475
        %v1477 = vmul.f32 %v1473, %v1464
        %v1478 = vmul.f32 %v1476, %v1464
        %v1479 = vadd.f32 %v1477, 1e-05
        %v1480 = vadd.f32 %v1478, 1e-05
        %v1481 = vrsqrt.pop %v1479
        %v1482 = vrsqrt.pop %v1480
        %v1483 = vmul.f32 %v1467, %v1481
        %v1484 = vmul.f32 %v1468, %v1482
        %v1485 = vld [vmem:[%s6] sm:$0x1]
        %v1487 = vlaneseq
        %v1488 = vshrl.u32 %v1487, 7
        %v1489 = vsub.s32 0, %v1488
        %v1490 = vrot.slane %v1485, %v1489
        %v1492 = vmul.f32 %v1483, %v1490
        %v1493 = vmul.f32 %v1484, %v1490
        %v1494 = vld [vmem:[%s7] sm:$0x1]
        %v1496 = vlaneseq
        %v1497 = vshrl.u32 %v1496, 7
        %v1498 = vsub.s32 0, %v1497
        %v1499 = vrot.slane %v1494, %v1498
        %v1501 = vadd.f32 %v1492, %v1499
        %v1502 = vadd.f32 %v1493, %v1499
        %1503 = vst.msk [vmem:[%s367] sm:$0xff] %vm376, %v1501
        %1504 = vst.msk [vmem:[%s367 + $0x8] sm:$0xff] %vm376, %v1502
        %s1505 = sand.u32 %s208, 1
        %s1506 = scalar_lea.sflag [#allocation4], %s1505
        %s1507 = sand.u32 %s208, 1
        %s1508 = smul.addr %s1507, 16
        %s1509 = scalar_lea.vmem [#allocation10], %s1508
        // Predicated region
        $region69: #{tpu_custom_call.1} parent=51 // pred_check
          %p1510 = pneg %p218
        $region70: #{tpu_custom_call.1} parent=51 // pred_check_branch
          %1512 = sbr.rel (%p1510) target = $region72
        $region71: #{tpu_custom_call.1} parent=51 // pred_region
          %s1513 = smul.u32 2, %s27
          %s1515 = ssub.s32 256, 256
          %1516 = vsyncadd %s1506, %s1515
          %s1517 = smul.addr %s1513, 128
          %s1518 = scalar_lea.hbm %s8, %s1517
          %s1519 = sshll.u32 %s1509, 4
          %s1520 = int_to_ptr.vmem [resolvable:$true] %s1519
          %1525 = dma.vmem_to_hbm [thread:$0]  %s1520, 256, %s1518, %s1506, 128, 128, 8
        $region72: #{tpu_custom_call.1} parent=51 // pred_fallthru
          _
      $region52: #{tpu_custom_call.1} parent=5 // pred_fallthru
        _
      %p1526 = scmp.le.s32.totalorder 2, %s22
      // Predicated region
      $region73: #{tpu_custom_call.1} parent=5 // pred_check
        %p1527 = pneg %p1526
      $region74: #{tpu_custom_call.1} parent=5 // pred_check_branch
        %1529 = sbr.rel (%p1527) target = $region76
      $region75: #{tpu_custom_call.1} parent=5 // pred_region
        %s1530 = ssub.s32 %s22, 2
        // Predicated region
        $region77: #{tpu_custom_call.1} parent=75 // pred_check
          %p1531 = pneg %p224
        $region78: #{tpu_custom_call.1} parent=75 // pred_check_branch
          %1533 = sbr.rel (%p1531) target = $region80
        $region79: #{tpu_custom_call.1} parent=75 // pred_region
          %s1534 = sand.u32 %s209, 1
          %s1535 = scalar_lea.sflag [#allocation4], %s1534
          %s1536 = sand.u32 %s209, 1
          %s1537 = smul.addr %s1536, 16
          %s1538 = scalar_lea.vmem [#allocation10], %s1537
          %1539 = dma.done %s1535, 256
        $region80: #{tpu_custom_call.1} parent=75 // pred_fallthru
          _
      $region76: #{tpu_custom_call.1} parent=5 // pred_fallthru
        _
    $region6: #{tpu_custom_call.1} parent=1 // loop_footer
      %s26 = sadd.s32 1, %s22
    $region7: #{tpu_custom_call.1} parent=1 // loop_footer_branch
      %21 = sbr.rel target = $region3
    $region8: #{tpu_custom_call.1} parent=1 // loop_exit
      _
    %1540 = vsyncpa [#allocation3], 1
    %s1541 = scalar_lea.sflag [#allocation3], 1
    %1542 = vsyncpa %s1541, 1
    %1543 = vsyncpa [#allocation6], 1
    %1544 = vsyncpa [#allocation9], 1
    %1545 = vsyncpa [#allocation4], 1
    %s1546 = scalar_lea.sflag [#allocation4], 1
    %1547 = vsyncpa %s1546, 1

</llo_original>
